<compile_context>
chip_gen: v5e
topology: v5e:2x2
jax: 0.10.0
libtpu: 0.0.40
codegen_flags: <defaults>
</compile_context>

<pallas_src>
import functools

import jax
import jax.numpy as jnp
from jax.experimental import pallas as pl
from jax.experimental.pallas import tpu as pltpu

NEG_INF = -1e30  # bias for lane-padded (fake) classes


# ---------------------------------------------------------------------------
# Pallas kernel: GNN forward for one block of GB graphs (all tensors in VMEM).
# ---------------------------------------------------------------------------
def gnn_kernel(a_ref, x_ref,
               w1l_ref, w1r_ref, b1_ref,
               w2l_ref, w2r_ref, b2_ref,
               w3_ref, b3_ref,
               prob_ref, idx_ref):
    gb, n, cin = x_ref.shape
    a = a_ref[...]                                        # (GB, N, N)   bf16
    x_flat = x_ref[...].reshape(gb * n, cin)              # (GB*N, Cin)  bf16

    # ---- SAGEConv layer 1 (aggr='mean'), reassociated: no concat, no slices
    #   h1 = relu( A @ (x @ W1l) + x @ W1r + b1 )
    xl = jnp.dot(x_flat, w1l_ref[...], preferred_element_type=jnp.float32)   # (GB*N, H)
    xr = jnp.dot(x_flat, w1r_ref[...], preferred_element_type=jnp.float32)   # (GB*N, H)
    h = xl.shape[-1]
    agg1 = jnp.einsum('gij,gjh->gih', a,
                      xl.astype(jnp.bfloat16).reshape(gb, n, h),
                      preferred_element_type=jnp.float32)                    # (GB, N, H)
    h1 = jnp.maximum(agg1 + xr.reshape(gb, n, h) + b1_ref[...], 0.0)         # ReLU

    # ---- SAGEConv layer 2, same reassociation with separate W2l / W2r ------
    h1_flat = h1.reshape(gb * n, h).astype(jnp.bfloat16)                     # (GB*N, H)
    p_l = jnp.dot(h1_flat, w2l_ref[...], preferred_element_type=jnp.float32) # (GB*N, h2)
    p_r = jnp.dot(h1_flat, w2r_ref[...], preferred_element_type=jnp.float32) # (GB*N, h2)
    h2w = p_l.shape[-1]
    agg2 = jnp.einsum('gij,gjh->gih', a,
                      p_l.astype(jnp.bfloat16).reshape(gb, n, h2w),
                      preferred_element_type=jnp.float32)                    # (GB, N, h2)
    h2 = jnp.maximum(agg2 + p_r.reshape(gb, n, h2w) + b2_ref[...], 0.0)      # ReLU

    # ---- global mean pool over nodes (per graph): x.sum(0) / N -------------
    pooled = jnp.sum(h2, axis=1) * (1.0 / n)                                 # (GB, h2)

    # ---- decoder: Linear into the lane-padded class dim (CPAD = 128) -------
    logits = jnp.dot(pooled.astype(jnp.bfloat16), w3_ref[...],
                     preferred_element_type=jnp.float32) + b3_ref[...]       # (GB, 128)

    # ---- argmax from logits (padded classes carry -1e30 bias, never win) ---
    ncols = logits.shape[-1]
    col = jax.lax.broadcasted_iota(jnp.int32, logits.shape, 1)
    maxv = jnp.max(logits, axis=-1, keepdims=True)
    cand = jnp.where(logits >= maxv, col, jnp.int32(ncols))
    idx_ref[...] = jnp.min(cand, axis=-1, keepdims=True).astype(jnp.int32)   # (GB, 1)

    # ---- softmax, exact divide; padded lanes underflow to exactly 0 --------
    e = jnp.exp(logits - maxv)
    prob_ref[...] = e / jnp.sum(e, axis=-1, keepdims=True)                   # (GB, 128)


# ---------------------------------------------------------------------------
# Plain-JAX glue (fused in the same jit): faces -> edges -> row-normalized
# dense adjacency.  Scatter-free: bf16 one-hot matmul with f32 accumulation
# (edge multiplicities are small integers, exact in bf16/f32).
# Matches torch.cat([face[:2], face[1:], face[[0,2]]], dim=1) + remove_self_loops
# + PyG mean aggregation over incoming edges.
# TODO(synk): for larger graphs, scalar-prefetch the edge list and build A in a
# VMEM scratch inside the kernel to avoid the HBM round-trip of A_norm.
# ---------------------------------------------------------------------------
def build_mean_adjacency(face, num_nodes):
    e1 = face[:2]                               # (v0, v1)
    e2 = face[1:]                               # (v1, v2)
    e3 = face[jnp.array([0, 2])]                # (v0, v2)
    edge_index = jnp.concatenate([e1, e2, e3], axis=1)       # (2, 3F)
    src, dst = edge_index[0], edge_index[1]
    valid = (src != dst).astype(jnp.bfloat16)                 # remove self loops

    dst_oh = jax.nn.one_hot(dst, num_nodes, dtype=jnp.bfloat16)          # (E, N)
    src_oh = jax.nn.one_hot(src, num_nodes, dtype=jnp.bfloat16) * valid[:, None]
    A = jnp.dot(dst_oh.T, src_oh, preferred_element_type=jnp.float32)    # (N, N)

    deg = A.sum(axis=1, keepdims=True)
    return jnp.where(deg > 0, A / jnp.maximum(deg, 1.0), 0.0)


def gnn_forward(pos, faces, params, *, num_classes, graphs_per_block=8):
    b, n, cin = pos.shape
    hidden = params["w1l"].shape[1]
    h2 = params["w2l"].shape[1]
    cpad = params["w3"].shape[1]

    gb = min(graphs_per_block, b)
    assert b % gb == 0 and (gb % 8 == 0 or gb == b), "graph block must tile the batch"

    a_norm = jax.vmap(build_mean_adjacency, in_axes=(0, None))(faces, n)
    a_norm = a_norm.astype(jnp.bfloat16)
    x = pos.astype(jnp.bfloat16)

    # Advisory cost hint so XLA can schedule/overlap around the custom call.
    flops = 2 * b * (n * cin * hidden * 2 + n * n * hidden
                     + n * hidden * h2 * 2 + n * n * h2 + h2 * cpad)
    bytes_accessed = int(a_norm.size * 2 + x.size * 2
                         + sum(int(p.size) * p.dtype.itemsize for p in params.values())
                         + 4 * b * (cpad + 1))
    cost = pl.CostEstimate(flops=flops, transcendentals=b * cpad,
                           bytes_accessed=bytes_accessed)

    const = lambda g: (0, 0)
    probs_pad, idx = pl.pallas_call(
        gnn_kernel,
        out_shape=(
            jax.ShapeDtypeStruct((b, cpad), jnp.float32),   # lane-dense padded probs
            jax.ShapeDtypeStruct((b, 1), jnp.int32),        # argmax per graph
        ),
        grid_spec=pltpu.PrefetchScalarGridSpec(
            num_scalar_prefetch=0,
            grid=(b // gb,),
            in_specs=[
                pl.BlockSpec((gb, n, n), lambda g: (g, 0, 0)),    # A_norm
                pl.BlockSpec((gb, n, cin), lambda g: (g, 0, 0)),  # x
                pl.BlockSpec((cin, hidden), const),               # W1l
                pl.BlockSpec((cin, hidden), const),               # W1r
                pl.BlockSpec((1, hidden), const),                 # b1
                pl.BlockSpec((hidden, h2), const),                # W2l
                pl.BlockSpec((hidden, h2), const),                # W2r
                pl.BlockSpec((1, h2), const),                     # b2
                pl.BlockSpec((h2, cpad), const),                  # W3 (lane-padded)
                pl.BlockSpec((1, cpad), const),                   # b3 (lane-padded)
            ],
            out_specs=(
                pl.BlockSpec((gb, cpad), lambda g: (g, 0)),
                pl.BlockSpec((gb, 1), lambda g: (g, 0)),
            ),
        ),
        compiler_params=pltpu.CompilerParams(
            dimension_semantics=("parallel",)),
        cost_estimate=cost,
    )(a_norm, x,
      params["w1l"], params["w1r"], params["b1"],
      params["w2l"], params["w2r"], params["b2"],
      params["w3"], params["b3"])

    return probs_pad[:, :num_classes], idx[:, 0]


# ---------------------------------------------------------------------------
# Deterministic synthetic parameter init (shapes follow the PyTorch module:
# in_channels=3, hidden_channels=H, hidden//2, num_classes=10), pre-split into
# the layouts the kernel consumes.  Class dim is lane-padded to 128; padded
# classes get bias -1e30 so they never influence softmax/argmax.
# ---------------------------------------------------------------------------
def init_params(key, in_channels, hidden, num_classes, class_pad=128):
    h2 = hidden // 2
    ks = jax.random.split(key, 5)

    def glorot(k, shape):
        fan_in, fan_out = shape
        scale = jnp.sqrt(6.0 / (fan_in + fan_out))
        return jax.random.uniform(k, shape, jnp.float32, -scale, scale)

    w3 = glorot(ks[4], (h2, num_classes))
    w3_pad = jnp.zeros((h2, class_pad), jnp.float32).at[:, :num_classes].set(w3)
    b3_pad = jnp.full((1, class_pad), NEG_INF, jnp.float32).at[:, :num_classes].set(0.0)

    return {
        "w1l": glorot(ks[0], (in_channels, hidden)).astype(jnp.bfloat16),  # lin_l (aggr)
        "w1r": glorot(ks[1], (in_channels, hidden)).astype(jnp.bfloat16),  # lin_r (self)
        "b1": jnp.zeros((1, hidden), jnp.float32),
        "w2l": glorot(ks[2], (hidden, h2)).astype(jnp.bfloat16),
        "w2r": glorot(ks[3], (hidden, h2)).astype(jnp.bfloat16),
        "b2": jnp.zeros((1, h2), jnp.float32),
        "w3": w3_pad.astype(jnp.bfloat16),                                  # (h2, 128)
        "b3": b3_pad,                                                       # (1, 128)
    }


if __name__ == "__main__":
    class_names = ['bathtub', 'bed', 'chair', 'desk', 'dresser',
                   'monitor', 'night_stand', 'sofa', 'table', 'toilet']

    B_GRAPHS = 16
    GRAPHS_PER_BLOCK = 8
    N_NODES = 32
    N_FACES = 48
    IN_CHANNELS = 3
    HIDDEN = 32
    NUM_CLASSES = len(class_names)

    key = jax.random.PRNGKey(0)
    k_pos, k_face, k_par = jax.random.split(key, 3)

    pos = jax.random.normal(k_pos, (B_GRAPHS, N_NODES, IN_CHANNELS), jnp.float32)
    faces = jax.random.randint(k_face, (B_GRAPHS, 3, N_FACES), 0, N_NODES, jnp.int32)
    params = init_params(k_par, IN_CHANNELS, HIDDEN, NUM_CLASSES)

    fwd = jax.jit(functools.partial(gnn_forward,
                                    num_classes=NUM_CLASSES,
                                    graphs_per_block=GRAPHS_PER_BLOCK))
    probs, pred_idx = fwd(pos, faces, params)
    probs = jax.block_until_ready(probs)
    pred_idx = jax.block_until_ready(pred_idx)

    assert probs.shape == (B_GRAPHS, NUM_CLASSES)
    assert pred_idx.shape == (B_GRAPHS,)
    assert bool(jnp.all(jnp.abs(jnp.sum(probs, axis=-1) - 1.0) < 1e-3))
    assert bool(jnp.all(probs >= 0.0))
    assert bool(jnp.all((pred_idx >= 0) & (pred_idx < NUM_CLASSES)))
    _ = [class_names[int(i)] for i in pred_idx]

    print("KERNEL_OK")
</pallas_src>

<mosaic_0001>
module attributes {stable_mosaic.version = 11 : i64} {
  func.func @gnn_kernel(%arg0: i32, %arg1: memref<8x32x32xbf16, #tpu.memory_space<vmem>>, %arg2: memref<8x32x3xbf16, #tpu.memory_space<vmem>>, %arg3: memref<3x32xbf16, #tpu.memory_space<vmem>>, %arg4: memref<3x32xbf16, #tpu.memory_space<vmem>>, %arg5: memref<1x32xf32, #tpu.memory_space<vmem>>, %arg6: memref<32x16xbf16, #tpu.memory_space<vmem>>, %arg7: memref<32x16xbf16, #tpu.memory_space<vmem>>, %arg8: memref<1x16xf32, #tpu.memory_space<vmem>>, %arg9: memref<16x128xbf16, #tpu.memory_space<vmem>>, %arg10: memref<1x128xf32, #tpu.memory_space<vmem>>, %arg11: memref<8x128xf32, #tpu.memory_space<vmem>>, %arg12: memref<8x1xi32, #tpu.memory_space<vmem>>) attributes {dimension_semantics = [#tpu.dimension_semantics<parallel>], iteration_bounds = array<i64: 2>, scalar_prefetch = 0 : i64, scratch_operands = 0 : i64, tpu.core_type = #tpu.core_type<tc>, window_params = [{transform_indices = @transform_0, window_bounds = array<i64: 8, 32, 32>}, {transform_indices = @transform_1, window_bounds = array<i64: 8, 32, 3>}, {pipeline_mode = #tpu.pipeline_mode<synchronous>, transform_indices = @transform_2, window_bounds = array<i64: 3, 32>}, {pipeline_mode = #tpu.pipeline_mode<synchronous>, transform_indices = @transform_3, window_bounds = array<i64: 3, 32>}, {pipeline_mode = #tpu.pipeline_mode<synchronous>, transform_indices = @transform_4, window_bounds = array<i64: 1, 32>}, {pipeline_mode = #tpu.pipeline_mode<synchronous>, transform_indices = @transform_5, window_bounds = array<i64: 32, 16>}, {pipeline_mode = #tpu.pipeline_mode<synchronous>, transform_indices = @transform_6, window_bounds = array<i64: 32, 16>}, {pipeline_mode = #tpu.pipeline_mode<synchronous>, transform_indices = @transform_7, window_bounds = array<i64: 1, 16>}, {pipeline_mode = #tpu.pipeline_mode<synchronous>, transform_indices = @transform_8, window_bounds = array<i64: 16, 128>}, {pipeline_mode = #tpu.pipeline_mode<synchronous>, transform_indices = @transform_9, window_bounds = array<i64: 1, 128>}, {transform_indices = @transform_10, window_bounds = array<i64: 8, 128>}, {transform_indices = @transform_11, window_bounds = array<i64: 8, 1>}]} {
    %c0 = arith.constant 0 : index
    %c0_0 = arith.constant 0 : index
    %c0_1 = arith.constant 0 : index
    %0 = vector.load %arg1[%c0, %c0_0, %c0_1] : memref<8x32x32xbf16, #tpu.memory_space<vmem>>, vector<8x32x32xbf16>
    %c0_2 = arith.constant 0 : index
    %c0_3 = arith.constant 0 : index
    %c0_4 = arith.constant 0 : index
    %1 = vector.load %arg2[%c0_2, %c0_3, %c0_4] : memref<8x32x3xbf16, #tpu.memory_space<vmem>>, vector<8x32x3xbf16>
    %2 = vector.shape_cast %1 : vector<8x32x3xbf16> to vector<256x3xbf16>
    %c0_5 = arith.constant 0 : index
    %c0_6 = arith.constant 0 : index
    %3 = vector.load %arg3[%c0_5, %c0_6] : memref<3x32xbf16, #tpu.memory_space<vmem>>, vector<3x32xbf16>
    %cst = arith.constant dense<0.000000e+00> : vector<256x32xf32>
    %4 = tpu.matmul %2, %3, %cst {dimension_numbers = #tpu.dot_dimension_numbers<[1], [0], [0], [1], [0, 0, 1, 1], [], []>} : vector<256x3xbf16>, vector<3x32xbf16>, vector<256x32xf32> -> vector<256x32xf32>
    %c0_7 = arith.constant 0 : index
    %c0_8 = arith.constant 0 : index
    %5 = vector.load %arg4[%c0_7, %c0_8] : memref<3x32xbf16, #tpu.memory_space<vmem>>, vector<3x32xbf16>
    %cst_9 = arith.constant dense<0.000000e+00> : vector<256x32xf32>
    %6 = tpu.matmul %2, %5, %cst_9 {dimension_numbers = #tpu.dot_dimension_numbers<[1], [0], [0], [1], [0, 0, 1, 1], [], []>} : vector<256x3xbf16>, vector<3x32xbf16>, vector<256x32xf32> -> vector<256x32xf32>
    %7 = arith.truncf %4 : vector<256x32xf32> to vector<256x32xbf16>
    %8 = vector.shape_cast %7 : vector<256x32xbf16> to vector<8x32x32xbf16>
    "tpu.trace_start"() <{level = 10 : i32, message = "gij,gjh->gih"}> : () -> ()
    %cst_10 = arith.constant dense<0.000000e+00> : vector<8x32x32xf32>
    %9 = tpu.matmul %0, %8, %cst_10 {dimension_numbers = #tpu.dot_dimension_numbers<[2], [1], [1], [2], [0, 0, 0, 1, 1, 2], [0], [0]>} : vector<8x32x32xbf16>, vector<8x32x32xbf16>, vector<8x32x32xf32> -> vector<8x32x32xf32>
    "tpu.trace_stop"() : () -> ()
    %10 = vector.shape_cast %6 : vector<256x32xf32> to vector<8x32x32xf32>
    %11 = arith.addf %9, %10 : vector<8x32x32xf32>
    %c0_11 = arith.constant 0 : index
    %c0_12 = arith.constant 0 : index
    %12 = vector.load %arg5[%c0_11, %c0_12] : memref<1x32xf32, #tpu.memory_space<vmem>>, vector<1x32xf32>
    %13 = vector.shape_cast %12 : vector<1x32xf32> to vector<1x1x32xf32>
    %14 = vector.broadcast %13 : vector<1x1x32xf32> to vector<8x32x32xf32>
    %15 = arith.addf %11, %14 : vector<8x32x32xf32>
    %cst_13 = arith.constant 0.000000e+00 : f32
    %16 = vector.broadcast %cst_13 : f32 to vector<8x32x32xf32>
    %17 = arith.maximumf %15, %16 : vector<8x32x32xf32>
    %18 = vector.shape_cast %17 : vector<8x32x32xf32> to vector<256x32xf32>
    %19 = arith.truncf %18 : vector<256x32xf32> to vector<256x32xbf16>
    %c0_14 = arith.constant 0 : index
    %c0_15 = arith.constant 0 : index
    %20 = vector.load %arg6[%c0_14, %c0_15] : memref<32x16xbf16, #tpu.memory_space<vmem>>, vector<32x16xbf16>
    %cst_16 = arith.constant dense<0.000000e+00> : vector<256x16xf32>
    %21 = tpu.matmul %19, %20, %cst_16 {dimension_numbers = #tpu.dot_dimension_numbers<[1], [0], [0], [1], [0, 0, 1, 1], [], []>} : vector<256x32xbf16>, vector<32x16xbf16>, vector<256x16xf32> -> vector<256x16xf32>
    %c0_17 = arith.constant 0 : index
    %c0_18 = arith.constant 0 : index
    %22 = vector.load %arg7[%c0_17, %c0_18] : memref<32x16xbf16, #tpu.memory_space<vmem>>, vector<32x16xbf16>
    %cst_19 = arith.constant dense<0.000000e+00> : vector<256x16xf32>
    %23 = tpu.matmul %19, %22, %cst_19 {dimension_numbers = #tpu.dot_dimension_numbers<[1], [0], [0], [1], [0, 0, 1, 1], [], []>} : vector<256x32xbf16>, vector<32x16xbf16>, vector<256x16xf32> -> vector<256x16xf32>
    %24 = arith.truncf %21 : vector<256x16xf32> to vector<256x16xbf16>
    %25 = vector.shape_cast %24 : vector<256x16xbf16> to vector<8x32x16xbf16>
    "tpu.trace_start"() <{level = 10 : i32, message = "gij,gjh->gih"}> : () -> ()
    %cst_20 = arith.constant dense<0.000000e+00> : vector<8x32x16xf32>
    %26 = tpu.matmul %0, %25, %cst_20 {dimension_numbers = #tpu.dot_dimension_numbers<[2], [1], [1], [2], [0, 0, 0, 1, 1, 2], [0], [0]>} : vector<8x32x32xbf16>, vector<8x32x16xbf16>, vector<8x32x16xf32> -> vector<8x32x16xf32>
    "tpu.trace_stop"() : () -> ()
    %27 = vector.shape_cast %23 : vector<256x16xf32> to vector<8x32x16xf32>
    %28 = arith.addf %26, %27 : vector<8x32x16xf32>
    %c0_21 = arith.constant 0 : index
    %c0_22 = arith.constant 0 : index
    %29 = vector.load %arg8[%c0_21, %c0_22] : memref<1x16xf32, #tpu.memory_space<vmem>>, vector<1x16xf32>
    %30 = vector.shape_cast %29 : vector<1x16xf32> to vector<1x1x16xf32>
    %31 = vector.broadcast %30 : vector<1x1x16xf32> to vector<8x32x16xf32>
    %32 = arith.addf %28, %31 : vector<8x32x16xf32>
    %cst_23 = arith.constant 0.000000e+00 : f32
    %33 = vector.broadcast %cst_23 : f32 to vector<8x32x16xf32>
    %34 = arith.maximumf %32, %33 : vector<8x32x16xf32>
    %cst_24 = arith.constant dense<0.000000e+00> : vector<8x16xf32>
    %35 = vector.multi_reduction <add>, %34, %cst_24 [1] : vector<8x32x16xf32> to vector<8x16xf32>
    %cst_25 = arith.constant 3.125000e-02 : f32
    %36 = vector.broadcast %cst_25 : f32 to vector<8x16xf32>
    %37 = arith.mulf %35, %36 : vector<8x16xf32>
    %38 = arith.truncf %37 : vector<8x16xf32> to vector<8x16xbf16>
    %c0_26 = arith.constant 0 : index
    %c0_27 = arith.constant 0 : index
    %39 = vector.load %arg9[%c0_26, %c0_27] : memref<16x128xbf16, #tpu.memory_space<vmem>>, vector<16x128xbf16>
    %cst_28 = arith.constant dense<0.000000e+00> : vector<8x128xf32>
    %40 = tpu.matmul %38, %39, %cst_28 {dimension_numbers = #tpu.dot_dimension_numbers<[1], [0], [0], [1], [0, 0, 1, 1], [], []>} : vector<8x16xbf16>, vector<16x128xbf16>, vector<8x128xf32> -> vector<8x128xf32>
    %c0_29 = arith.constant 0 : index
    %c0_30 = arith.constant 0 : index
    %41 = vector.load %arg10[%c0_29, %c0_30] : memref<1x128xf32, #tpu.memory_space<vmem>>, vector<1x128xf32>
    %42 = vector.broadcast %41 : vector<1x128xf32> to vector<8x128xf32>
    %43 = arith.addf %40, %42 : vector<8x128xf32>
    %44 = tpu.iota {dimensions = array<i32: 1>} : vector<8x128xi32>
    %cst_31 = arith.constant dense<0xFF800000> : vector<8xf32>
    %45 = vector.multi_reduction <maximumf>, %43, %cst_31 [1] : vector<8x128xf32> to vector<8xf32>
    %46 = vector.shape_cast %45 : vector<8xf32> to vector<8x1xf32>
    %47 = vector.broadcast %46 : vector<8x1xf32> to vector<8x128xf32>
    %48 = arith.cmpf oge, %43, %47 : vector<8x128xf32>
    %c128_i32 = arith.constant 128 : i32
    %49 = vector.broadcast %c128_i32 : i32 to vector<8x128xi32>
    %50 = arith.select %48, %44, %49 : vector<8x128xi1>, vector<8x128xi32>
    %cst_32 = arith.constant dense<2147483647> : vector<8xi32>
    %51 = vector.multi_reduction <minsi>, %50, %cst_32 [1] : vector<8x128xi32> to vector<8xi32>
    %52 = vector.shape_cast %51 : vector<8xi32> to vector<8x1xi32>
    %c0_33 = arith.constant 0 : index
    %c0_34 = arith.constant 0 : index
    %53 = vector.load %arg12[%c0_33, %c0_34] : memref<8x1xi32, #tpu.memory_space<vmem>>, vector<8x1xi32>
    tpu.vector_store %arg12[%c0_33, %c0_34], %52 {strides = array<i32>} : memref<8x1xi32, #tpu.memory_space<vmem>>, vector<8x1xi32>,
    %54 = vector.broadcast %46 : vector<8x1xf32> to vector<8x128xf32>
    %55 = arith.subf %43, %54 : vector<8x128xf32>
    %56 = math.exp %55 : vector<8x128xf32>
    %cst_35 = arith.constant dense<0.000000e+00> : vector<8xf32>
    %57 = vector.multi_reduction <add>, %56, %cst_35 [1] : vector<8x128xf32> to vector<8xf32>
    %58 = vector.shape_cast %57 : vector<8xf32> to vector<8x1xf32>
    %59 = vector.broadcast %58 : vector<8x1xf32> to vector<8x128xf32>
    %60 = arith.divf %56, %59 : vector<8x128xf32>
    %c0_36 = arith.constant 0 : index
    %c0_37 = arith.constant 0 : index
    %61 = vector.load %arg11[%c0_36, %c0_37] : memref<8x128xf32, #tpu.memory_space<vmem>>, vector<8x128xf32>
    tpu.vector_store %arg11[%c0_36, %c0_37], %60 {strides = array<i32>} : memref<8x128xf32, #tpu.memory_space<vmem>>, vector<8x128xf32>,
    return
  }
  func.func @transform_0(%arg0: i32) -> (i32, i32, i32) {
    %c0_i32 = arith.constant 0 : i32
    %c0_i32_0 = arith.constant 0 : i32
    %c0_i32_1 = arith.constant 0 : i32
    return %arg0, %c0_i32, %c0_i32_0 : i32, i32, i32
  }
  func.func @transform_1(%arg0: i32) -> (i32, i32, i32) {
    %c0_i32 = arith.constant 0 : i32
    %c0_i32_0 = arith.constant 0 : i32
    %c0_i32_1 = arith.constant 0 : i32
    return %arg0, %c0_i32, %c0_i32_0 : i32, i32, i32
  }
  func.func @transform_2(%arg0: i32) -> (i32, i32) {
    %c0_i32 = arith.constant 0 : i32
    %c0_i32_0 = arith.constant 0 : i32
    %c0_i32_1 = arith.constant 0 : i32
    return %c0_i32, %c0_i32_0 : i32, i32
  }
  func.func @transform_3(%arg0: i32) -> (i32, i32) {
    %c0_i32 = arith.constant 0 : i32
    %c0_i32_0 = arith.constant 0 : i32
    %c0_i32_1 = arith.constant 0 : i32
    return %c0_i32, %c0_i32_0 : i32, i32
  }
  func.func @transform_4(%arg0: i32) -> (i32, i32) {
    %c0_i32 = arith.constant 0 : i32
    %c0_i32_0 = arith.constant 0 : i32
    %c0_i32_1 = arith.constant 0 : i32
    return %c0_i32, %c0_i32_0 : i32, i32
  }
  func.func @transform_5(%arg0: i32) -> (i32, i32) {
    %c0_i32 = arith.constant 0 : i32
    %c0_i32_0 = arith.constant 0 : i32
    %c0_i32_1 = arith.constant 0 : i32
    return %c0_i32, %c0_i32_0 : i32, i32
  }
  func.func @transform_6(%arg0: i32) -> (i32, i32) {
    %c0_i32 = arith.constant 0 : i32
    %c0_i32_0 = arith.constant 0 : i32
    %c0_i32_1 = arith.constant 0 : i32
    return %c0_i32, %c0_i32_0 : i32, i32
  }
  func.func @transform_7(%arg0: i32) -> (i32, i32) {
    %c0_i32 = arith.constant 0 : i32
    %c0_i32_0 = arith.constant 0 : i32
    %c0_i32_1 = arith.constant 0 : i32
    return %c0_i32, %c0_i32_0 : i32, i32
  }
  func.func @transform_8(%arg0: i32) -> (i32, i32) {
    %c0_i32 = arith.constant 0 : i32
    %c0_i32_0 = arith.constant 0 : i32
    %c0_i32_1 = arith.constant 0 : i32
    return %c0_i32, %c0_i32_0 : i32, i32
  }
  func.func @transform_9(%arg0: i32) -> (i32, i32) {
    %c0_i32 = arith.constant 0 : i32
    %c0_i32_0 = arith.constant 0 : i32
    %c0_i32_1 = arith.constant 0 : i32
    return %c0_i32, %c0_i32_0 : i32, i32
  }
  func.func @transform_10(%arg0: i32) -> (i32, i32) {
    %c0_i32 = arith.constant 0 : i32
    %c0_i32_0 = arith.constant 0 : i32
    return %arg0, %c0_i32 : i32, i32
  }
  func.func @transform_11(%arg0: i32) -> (i32, i32) {
    %c0_i32 = arith.constant 0 : i32
    %c0_i32_0 = arith.constant 0 : i32
    return %arg0, %c0_i32 : i32, i32
  }
}

</mosaic_0001>

<llo_original>
// kernel: gnn_forward.1
$region0: #{gnn_forward.1}
  #allocation0 [shape = 'u32[]', space=smem, size = 0x4, offset = 0x4, fixed_abs, tag = 'smem constant byte address 0x4 - core index']
  #allocation1 [shape = 'u32[72,128]{1,0:T(1,128)}', space=vmem, size = 0x9000, scoped, tag = 'internal scratch']
  %s0 = inlined_call_operand.vmem [shape: bf16[16,32,32], index: 0, kind: input, shape index: {}]
  %s1 = inlined_call_operand.vmem [shape: bf16[16,32,3], index: 1, kind: input, shape index: {}]
  %s2 = inlined_call_operand.vmem [shape: bf16[3,32], index: 2, kind: input, shape index: {}]
  %s3 = inlined_call_operand.vmem [shape: bf16[3,32], index: 3, kind: input, shape index: {}]
  %s4 = inlined_call_operand.vmem [shape: f32[1,32], index: 4, kind: input, shape index: {}]
  %s5 = inlined_call_operand.vmem [shape: bf16[32,16], index: 5, kind: input, shape index: {}]
  %s6 = inlined_call_operand.vmem [shape: bf16[32,16], index: 6, kind: input, shape index: {}]
  %s7 = inlined_call_operand.vmem [shape: f32[1,16], index: 7, kind: input, shape index: {}]
  %s8 = inlined_call_operand.vmem [shape: bf16[16,128], index: 8, kind: input, shape index: {}]
  %s9 = inlined_call_operand.vmem [shape: f32[1,128], index: 9, kind: input, shape index: {}]
  %s10 = inlined_call_operand.hbm [shape: f32[16,128], index: 10, kind: output, shape index: {0}]
  %s11 = inlined_call_operand.vmem [shape: s32[16,1], index: 11, kind: output, shape index: {1}]
  %12 = xla_tuple %s10, %s11
  %s13 = sld [smem:[#allocation0]]
  $region81: #{gnn_forward.1} parent=0
    _
  %s15 = ssub.s32 1, %s13
  %s16 = scalar_select 0, %s15, %s13
  $region1: #{gnn_forward.1} parent=0
    #allocation2 [shape = 'u8[8192]{0}', space=vmem, size = 0x2000, scoped, tag = 'output window, operand 0']
    #allocation3 [shape = 's32[2]{0}', space=sflag, size = 0x8, scoped, tag = 'scoped memory for gnn_forward.1']
    %17 = vsyncpa [#allocation3], 0
    %s18 = scalar_lea.sflag [#allocation3], 1
    %19 = vsyncpa %s18, 0
    loop: start=0, step=1, limit=4
    $region2: #{gnn_forward.1} parent=1 // loop_pre_header
      _
    $region3: #{gnn_forward.1} parent=1 // loop_header
      %s21 = sphi 0, %s25
      %p22 = scmp.ge.s32.totalorder %s21, 4
      %s31 = sphi 0, %s33
      %s34 = sphi 0, %s31
      %s35 = sphi 0, %s34
      %s51 = sphi 0, %s35
      %s57 = sphi 0, %s59
      %s60 = sphi 0, %s57
      %s61 = sphi 0, %s60
      %s77 = sphi 0, %s61
      %s81 = sphi 0, %s81
      %s83 = sphi 0, %s81
      %s84 = sphi 0, %s83
      %s98 = sphi 0, %s84
      %s102 = sphi 0, %s102
      %s104 = sphi 0, %s102
      %s105 = sphi 0, %s104
      %s119 = sphi 0, %s105
      %s123 = sphi 0, %s123
      %s125 = sphi 0, %s123
      %s126 = sphi 0, %s125
      %s140 = sphi 0, %s126
      %s144 = sphi 0, %s144
      %s146 = sphi 0, %s144
      %s147 = sphi 0, %s146
      %s161 = sphi 0, %s147
      %s165 = sphi 0, %s165
      %s167 = sphi 0, %s165
      %s168 = sphi 0, %s167
      %s182 = sphi 0, %s168
      %s186 = sphi 0, %s186
      %s188 = sphi 0, %s186
      %s189 = sphi 0, %s188
      %s203 = sphi 0, %s189
      %s207 = sphi 0, %s207
      %s209 = sphi 0, %s207
      %s210 = sphi 0, %s209
      %s224 = sphi 0, %s210
      %s228 = sphi 0, %s228
      %s230 = sphi 0, %s228
      %s231 = sphi 0, %s230
      %s245 = sphi 0, %s231
      %s251 = sphi 0, %s253
      %s254 = sphi 0, %s251
      %s255 = sphi 0, %s254
      %s271 = sphi 0, %s255
      %s277 = sphi 0, %s279
      %s280 = sphi 0, %s277
      %s281 = sphi 0, %s280
      %s297 = sphi 0, %s281
    $region4: #{gnn_forward.1} parent=1 // loop_header_branch
      %24 = sbr.rel (%p22) target = $region8
    $region5: #{gnn_forward.1} parent=1 // loop_body
      %s26 = ssub.s32 %s21, 1
      %s27 = ssub.s32 %s21, 2
      %s28 = sadd.s32 %s21, 1
      %s29 = ssub.s32 %s21, %s28
      %p30 = scmp.eq.s32.totalorder %s29, 0
      %s32 = sadd.s32 %s31, 1
      %s33 = scalar_select %p30, %s31, %s32
      %p36 = pneg %p30
      %p37 = scmp.eq.s32.totalorder %s21, 1
      %p38 = por %p36, %p37
      %p39 = scmp.ne.s32.totalorder %s31, %s34
      %p40 = scmp.eq.s32.totalorder %s21, 0
      %p41 = por %p39, %p40
      %p42 = scmp.ne.s32.totalorder %s31, %s34
      %p43 = scmp.eq.s32.totalorder %s26, 1
      %p44 = por %p42, %p43
      %p45 = scmp.ne.s32.totalorder %s34, %s35
      %p46 = scmp.eq.s32.totalorder %s26, 0
      %p47 = por %p45, %p46
      %p48 = scmp.ne.s32.totalorder %s34, %s35
      %p49 = scmp.eq.s32.totalorder %s27, 1
      %p50 = por %p48, %p49
      %p52 = scmp.ne.s32.totalorder %s35, %s51
      %p53 = scmp.eq.s32.totalorder %s27, 0
      %p54 = por %p52, %p53
      %s55 = ssub.s32 %s21, %s28
      %p56 = scmp.eq.s32.totalorder %s55, 0
      %s58 = sadd.s32 %s57, 1
      %s59 = scalar_select %p56, %s57, %s58
      %p62 = pneg %p56
      %p63 = scmp.eq.s32.totalorder %s21, 1
      %p64 = por %p62, %p63
      %p65 = scmp.ne.s32.totalorder %s57, %s60
      %p66 = scmp.eq.s32.totalorder %s21, 0
      %p67 = por %p65, %p66
      %p68 = scmp.ne.s32.totalorder %s57, %s60
      %p69 = scmp.eq.s32.totalorder %s26, 1
      %p70 = por %p68, %p69
      %p71 = scmp.ne.s32.totalorder %s60, %s61
      %p72 = scmp.eq.s32.totalorder %s26, 0
      %p73 = por %p71, %p72
      %p74 = scmp.ne.s32.totalorder %s60, %s61
      %p75 = scmp.eq.s32.totalorder %s27, 1
      %p76 = por %p74, %p75
      %p78 = scmp.ne.s32.totalorder %s61, %s77
      %p79 = scmp.eq.s32.totalorder %s27, 0
      %p80 = por %p78, %p79
      %s82 = sadd.s32 %s81, 1
      %p85 = scmp.eq.s32.totalorder %s21, 1
      %p86 = scmp.ne.s32.totalorder %s81, %s83
      %p87 = scmp.eq.s32.totalorder %s21, 0
      %p88 = por %p86, %p87
      %p89 = scmp.ne.s32.totalorder %s81, %s83
      %p90 = scmp.eq.s32.totalorder %s26, 1
      %p91 = por %p89, %p90
      %p92 = scmp.ne.s32.totalorder %s83, %s84
      %p93 = scmp.eq.s32.totalorder %s26, 0
      %p94 = por %p92, %p93
      %p95 = scmp.ne.s32.totalorder %s83, %s84
      %p96 = scmp.eq.s32.totalorder %s27, 1
      %p97 = por %p95, %p96
      %p99 = scmp.ne.s32.totalorder %s84, %s98
      %p100 = scmp.eq.s32.totalorder %s27, 0
      %p101 = por %p99, %p100
      %s103 = sadd.s32 %s102, 1
      %p106 = scmp.eq.s32.totalorder %s21, 1
      %p107 = scmp.ne.s32.totalorder %s102, %s104
      %p108 = scmp.eq.s32.totalorder %s21, 0
      %p109 = por %p107, %p108
      %p110 = scmp.ne.s32.totalorder %s102, %s104
      %p111 = scmp.eq.s32.totalorder %s26, 1
      %p112 = por %p110, %p111
      %p113 = scmp.ne.s32.totalorder %s104, %s105
      %p114 = scmp.eq.s32.totalorder %s26, 0
      %p115 = por %p113, %p114
      %p116 = scmp.ne.s32.totalorder %s104, %s105
      %p117 = scmp.eq.s32.totalorder %s27, 1
      %p118 = por %p116, %p117
      %p120 = scmp.ne.s32.totalorder %s105, %s119
      %p121 = scmp.eq.s32.totalorder %s27, 0
      %p122 = por %p120, %p121
      %s124 = sadd.s32 %s123, 1
      %p127 = scmp.eq.s32.totalorder %s21, 1
      %p128 = scmp.ne.s32.totalorder %s123, %s125
      %p129 = scmp.eq.s32.totalorder %s21, 0
      %p130 = por %p128, %p129
      %p131 = scmp.ne.s32.totalorder %s123, %s125
      %p132 = scmp.eq.s32.totalorder %s26, 1
      %p133 = por %p131, %p132
      %p134 = scmp.ne.s32.totalorder %s125, %s126
      %p135 = scmp.eq.s32.totalorder %s26, 0
      %p136 = por %p134, %p135
      %p137 = scmp.ne.s32.totalorder %s125, %s126
      %p138 = scmp.eq.s32.totalorder %s27, 1
      %p139 = por %p137, %p138
      %p141 = scmp.ne.s32.totalorder %s126, %s140
      %p142 = scmp.eq.s32.totalorder %s27, 0
      %p143 = por %p141, %p142
      %s145 = sadd.s32 %s144, 1
      %p148 = scmp.eq.s32.totalorder %s21, 1
      %p149 = scmp.ne.s32.totalorder %s144, %s146
      %p150 = scmp.eq.s32.totalorder %s21, 0
      %p151 = por %p149, %p150
      %p152 = scmp.ne.s32.totalorder %s144, %s146
      %p153 = scmp.eq.s32.totalorder %s26, 1
      %p154 = por %p152, %p153
      %p155 = scmp.ne.s32.totalorder %s146, %s147
      %p156 = scmp.eq.s32.totalorder %s26, 0
      %p157 = por %p155, %p156
      %p158 = scmp.ne.s32.totalorder %s146, %s147
      %p159 = scmp.eq.s32.totalorder %s27, 1
      %p160 = por %p158, %p159
      %p162 = scmp.ne.s32.totalorder %s147, %s161
      %p163 = scmp.eq.s32.totalorder %s27, 0
      %p164 = por %p162, %p163
      %s166 = sadd.s32 %s165, 1
      %p169 = scmp.eq.s32.totalorder %s21, 1
      %p170 = scmp.ne.s32.totalorder %s165, %s167
      %p171 = scmp.eq.s32.totalorder %s21, 0
      %p172 = por %p170, %p171
      %p173 = scmp.ne.s32.totalorder %s165, %s167
      %p174 = scmp.eq.s32.totalorder %s26, 1
      %p175 = por %p173, %p174
      %p176 = scmp.ne.s32.totalorder %s167, %s168
      %p177 = scmp.eq.s32.totalorder %s26, 0
      %p178 = por %p176, %p177
      %p179 = scmp.ne.s32.totalorder %s167, %s168
      %p180 = scmp.eq.s32.totalorder %s27, 1
      %p181 = por %p179, %p180
      %p183 = scmp.ne.s32.totalorder %s168, %s182
      %p184 = scmp.eq.s32.totalorder %s27, 0
      %p185 = por %p183, %p184
      %s187 = sadd.s32 %s186, 1
      %p190 = scmp.eq.s32.totalorder %s21, 1
      %p191 = scmp.ne.s32.totalorder %s186, %s188
      %p192 = scmp.eq.s32.totalorder %s21, 0
      %p193 = por %p191, %p192
      %p194 = scmp.ne.s32.totalorder %s186, %s188
      %p195 = scmp.eq.s32.totalorder %s26, 1
      %p196 = por %p194, %p195
      %p197 = scmp.ne.s32.totalorder %s188, %s189
      %p198 = scmp.eq.s32.totalorder %s26, 0
      %p199 = por %p197, %p198
      %p200 = scmp.ne.s32.totalorder %s188, %s189
      %p201 = scmp.eq.s32.totalorder %s27, 1
      %p202 = por %p200, %p201
      %p204 = scmp.ne.s32.totalorder %s189, %s203
      %p205 = scmp.eq.s32.totalorder %s27, 0
      %p206 = por %p204, %p205
      %s208 = sadd.s32 %s207, 1
      %p211 = scmp.eq.s32.totalorder %s21, 1
      %p212 = scmp.ne.s32.totalorder %s207, %s209
      %p213 = scmp.eq.s32.totalorder %s21, 0
      %p214 = por %p212, %p213
      %p215 = scmp.ne.s32.totalorder %s207, %s209
      %p216 = scmp.eq.s32.totalorder %s26, 1
      %p217 = por %p215, %p216
      %p218 = scmp.ne.s32.totalorder %s209, %s210
      %p219 = scmp.eq.s32.totalorder %s26, 0
      %p220 = por %p218, %p219
      %p221 = scmp.ne.s32.totalorder %s209, %s210
      %p222 = scmp.eq.s32.totalorder %s27, 1
      %p223 = por %p221, %p222
      %p225 = scmp.ne.s32.totalorder %s210, %s224
      %p226 = scmp.eq.s32.totalorder %s27, 0
      %p227 = por %p225, %p226
      %s229 = sadd.s32 %s228, 1
      %p232 = scmp.eq.s32.totalorder %s21, 1
      %p233 = scmp.ne.s32.totalorder %s228, %s230
      %p234 = scmp.eq.s32.totalorder %s21, 0
      %p235 = por %p233, %p234
      %p236 = scmp.ne.s32.totalorder %s228, %s230
      %p237 = scmp.eq.s32.totalorder %s26, 1
      %p238 = por %p236, %p237
      %p239 = scmp.ne.s32.totalorder %s230, %s231
      %p240 = scmp.eq.s32.totalorder %s26, 0
      %p241 = por %p239, %p240
      %p242 = scmp.ne.s32.totalorder %s230, %s231
      %p243 = scmp.eq.s32.totalorder %s27, 1
      %p244 = por %p242, %p243
      %p246 = scmp.ne.s32.totalorder %s231, %s245
      %p247 = scmp.eq.s32.totalorder %s27, 0
      %p248 = por %p246, %p247
      %s249 = ssub.s32 %s21, %s28
      %p250 = scmp.eq.s32.totalorder %s249, 0
      %s252 = sadd.s32 %s251, 1
      %s253 = scalar_select %p250, %s251, %s252
      %p256 = pneg %p250
      %p257 = scmp.eq.s32.totalorder %s21, 1
      %p258 = por %p256, %p257
      %p259 = scmp.ne.s32.totalorder %s251, %s254
      %p260 = scmp.eq.s32.totalorder %s21, 0
      %p261 = por %p259, %p260
      %p262 = scmp.ne.s32.totalorder %s251, %s254
      %p263 = scmp.eq.s32.totalorder %s26, 1
      %p264 = por %p262, %p263
      %p265 = scmp.ne.s32.totalorder %s254, %s255
      %p266 = scmp.eq.s32.totalorder %s26, 0
      %p267 = por %p265, %p266
      %p268 = scmp.ne.s32.totalorder %s254, %s255
      %p269 = scmp.eq.s32.totalorder %s27, 1
      %p270 = por %p268, %p269
      %p272 = scmp.ne.s32.totalorder %s255, %s271
      %p273 = scmp.eq.s32.totalorder %s27, 0
      %p274 = por %p272, %p273
      %s275 = ssub.s32 %s21, %s28
      %p276 = scmp.eq.s32.totalorder %s275, 0
      %s278 = sadd.s32 %s277, 1
      %s279 = scalar_select %p276, %s277, %s278
      %p282 = pneg %p276
      %p283 = scmp.eq.s32.totalorder %s21, 1
      %p284 = por %p282, %p283
      %p285 = scmp.ne.s32.totalorder %s277, %s280
      %p286 = scmp.eq.s32.totalorder %s21, 0
      %p287 = por %p285, %p286
      %p288 = scmp.ne.s32.totalorder %s277, %s280
      %p289 = scmp.eq.s32.totalorder %s26, 1
      %p290 = por %p288, %p289
      %p291 = scmp.ne.s32.totalorder %s280, %s281
      %p292 = scmp.eq.s32.totalorder %s26, 0
      %p293 = por %p291, %p292
      %p294 = scmp.ne.s32.totalorder %s280, %s281
      %p295 = scmp.eq.s32.totalorder %s27, 1
      %p296 = por %p294, %p295
      %p298 = scmp.ne.s32.totalorder %s281, %s297
      %p299 = scmp.eq.s32.totalorder %s27, 0
      %p300 = por %p298, %p299
      %p301 = scmp.le.s32.totalorder 1, %s21
      %p302 = scmp.lt.s32.totalorder %s21, 3
      %p303 = pnand %p301, %p302
      %p304 = pneg %p303
      // Predicated region
      $region9: #{gnn_forward.1} parent=5 // pred_check
        _
      $region10: #{gnn_forward.1} parent=5 // pred_check_branch
        %306 = sbr.rel (%p303) target = $region12
      $region11: #{gnn_forward.1} parent=5 // pred_region
        %s307 = ssub.s32 %s21, 1
        // Predicated region
        $region13: #{gnn_forward.1} parent=11 // pred_check
          %p308 = pneg %p94
        $region14: #{gnn_forward.1} parent=11 // pred_check_branch
          %310 = sbr.rel (%p308) target = $region16
        $region15: #{gnn_forward.1} parent=11 // pred_region
          _
        $region16: #{gnn_forward.1} parent=11 // pred_fallthru
          _
        // Predicated region
        $region17: #{gnn_forward.1} parent=11 // pred_check
          %p311 = pneg %p115
        $region18: #{gnn_forward.1} parent=11 // pred_check_branch
          %313 = sbr.rel (%p311) target = $region20
        $region19: #{gnn_forward.1} parent=11 // pred_region
          _
        $region20: #{gnn_forward.1} parent=11 // pred_fallthru
          _
        // Predicated region
        $region21: #{gnn_forward.1} parent=11 // pred_check
          %p314 = pneg %p136
        $region22: #{gnn_forward.1} parent=11 // pred_check_branch
          %316 = sbr.rel (%p314) target = $region24
        $region23: #{gnn_forward.1} parent=11 // pred_region
          _
        $region24: #{gnn_forward.1} parent=11 // pred_fallthru
          _
        // Predicated region
        $region25: #{gnn_forward.1} parent=11 // pred_check
          %p317 = pneg %p157
        $region26: #{gnn_forward.1} parent=11 // pred_check_branch
          %319 = sbr.rel (%p317) target = $region28
        $region27: #{gnn_forward.1} parent=11 // pred_region
          _
        $region28: #{gnn_forward.1} parent=11 // pred_fallthru
          _
        // Predicated region
        $region29: #{gnn_forward.1} parent=11 // pred_check
          %p320 = pneg %p178
        $region30: #{gnn_forward.1} parent=11 // pred_check_branch
          %322 = sbr.rel (%p320) target = $region32
        $region31: #{gnn_forward.1} parent=11 // pred_region
          _
        $region32: #{gnn_forward.1} parent=11 // pred_fallthru
          _
        // Predicated region
        $region33: #{gnn_forward.1} parent=11 // pred_check
          %p323 = pneg %p199
        $region34: #{gnn_forward.1} parent=11 // pred_check_branch
          %325 = sbr.rel (%p323) target = $region36
        $region35: #{gnn_forward.1} parent=11 // pred_region
          _
        $region36: #{gnn_forward.1} parent=11 // pred_fallthru
          _
        // Predicated region
        $region37: #{gnn_forward.1} parent=11 // pred_check
          %p326 = pneg %p220
        $region38: #{gnn_forward.1} parent=11 // pred_check_branch
          %328 = sbr.rel (%p326) target = $region40
        $region39: #{gnn_forward.1} parent=11 // pred_region
          _
        $region40: #{gnn_forward.1} parent=11 // pred_fallthru
          _
        // Predicated region
        $region41: #{gnn_forward.1} parent=11 // pred_check
          %p329 = pneg %p241
        $region42: #{gnn_forward.1} parent=11 // pred_check_branch
          %331 = sbr.rel (%p329) target = $region44
        $region43: #{gnn_forward.1} parent=11 // pred_region
          _
        $region44: #{gnn_forward.1} parent=11 // pred_fallthru
          _
      $region12: #{gnn_forward.1} parent=5 // pred_fallthru
        _
      %p332 = scmp.lt.s32.totalorder %s21, 2
      // Predicated region
      $region45: #{gnn_forward.1} parent=5 // pred_check
        %p333 = pneg %p332
      $region46: #{gnn_forward.1} parent=5 // pred_check_branch
        %335 = sbr.rel (%p333) target = $region48
      $region47: #{gnn_forward.1} parent=5 // pred_region
        // Predicated region
        $region49: #{gnn_forward.1} parent=47 // pred_check
          %p336 = pneg %p41
        $region50: #{gnn_forward.1} parent=47 // pred_check_branch
          %338 = sbr.rel (%p336) target = $region52
        $region51: #{gnn_forward.1} parent=47 // pred_region
          %s339 = smul.u32 8, %s21
          %p340 = scmp.lt.s32.totalorder %s339, 15
          %s341 = scalar_select %p340, %s339, 15
          %s342 = smul.addr %s341, 4
          %s343 = smul.addr %s342, 4
          %s344 = scalar_lea.vmem %s0, %s343
          %s345 = smul.u32 8, %s21
        $region52: #{gnn_forward.1} parent=47 // pred_fallthru
          _
        // Predicated region
        $region53: #{gnn_forward.1} parent=47 // pred_check
          %p346 = pneg %p67
        $region54: #{gnn_forward.1} parent=47 // pred_check_branch
          %348 = sbr.rel (%p346) target = $region56
        $region55: #{gnn_forward.1} parent=47 // pred_region
          %s349 = smul.u32 8, %s21
          %p350 = scmp.lt.s32.totalorder %s349, 15
          %s351 = scalar_select %p350, %s349, 15
          %s352 = smul.addr %s351, 4
          %s353 = smul.addr %s352, 4
          %s354 = scalar_lea.vmem %s1, %s353
          %s355 = smul.u32 8, %s21
        $region56: #{gnn_forward.1} parent=47 // pred_fallthru
          _
      $region48: #{gnn_forward.1} parent=5 // pred_fallthru
        _
      %p356 = scmp.le.s32.totalorder 1, %s21
      %p357 = scmp.lt.s32.totalorder %s21, 3
      %p358 = pnand %p356, %p357
      %p359 = pneg %p358
      // Predicated region
      $region57: #{gnn_forward.1} parent=5 // pred_check
        _
      $region58: #{gnn_forward.1} parent=5 // pred_check_branch
        %361 = sbr.rel (%p358) target = $region60
      $region59: #{gnn_forward.1} parent=5 // pred_region
        %s362 = ssub.s32 %s21, 1
        %s363 = smul.u32 8, %s26
        %p364 = scmp.lt.s32.totalorder %s363, 15
        %s365 = scalar_select %p364, %s363, 15
        %s366 = smul.addr %s365, 4
        %s367 = smul.addr %s366, 4
        %s368 = scalar_lea.vmem %s0, %s367
        %p369 = pneg %p47
        %p370 = pneg %p44
        %s371 = smul.u32 8, %s26
        %p372 = scmp.lt.s32.totalorder %s371, 15
        %s373 = scalar_select %p372, %s371, 15
        %s374 = smul.addr %s373, 4
        %s375 = smul.addr %s374, 4
        %s376 = scalar_lea.vmem %s1, %s375
        %p377 = pneg %p73
        %p378 = pneg %p70
        %p379 = pneg %p94
        %p380 = pneg %p91
        %p381 = pneg %p115
        %p382 = pneg %p112
        %p383 = pneg %p136
        %p384 = pneg %p133
        %p385 = pneg %p157
        %p386 = pneg %p154
        %p387 = pneg %p178
        %p388 = pneg %p175
        %p389 = pneg %p199
        %p390 = pneg %p196
        %p391 = pneg %p220
        %p392 = pneg %p217
        %p393 = pneg %p241
        %p394 = pneg %p238
        %p395 = pneg %p267
        %p396 = pneg %p264
        %s397 = sand.u32 %s254, 1
        %s398 = scalar_lea.sflag [#allocation3], %s397
        %s399 = sand.u32 %s254, 1
        %s400 = smul.addr %s399, 8
        %s401 = scalar_lea.vmem [#allocation2], %s400
        %p402 = pneg %p293
        %p403 = pneg %p290
        %p404 = scmp.lt.s32.totalorder %s26, 1
        %s405 = scalar_select %p404, %s26, 1
        %s406 = smul.addr %s405, 8
        %s407 = scalar_lea.vmem %s11, %s406
        %s408 = smul.u32 8, %s26
        %p409 = scmp.lt.s32.totalorder %s408, 15
        %s410 = scalar_select %p409, %s408, 15
        %s411 = smul.addr %s410, 4
        %s412 = smul.addr %s411, 4
        %s413 = scalar_lea.vmem %s0, %s412
        %s414 = smul.u32 8, %s26
        %s415 = smul.u32 8, %s26
        %p416 = scmp.lt.s32.totalorder %s415, 15
        %s417 = scalar_select %p416, %s415, 15
        %s418 = smul.addr %s417, 4
        %s419 = smul.addr %s418, 4
        %s420 = scalar_lea.vmem %s1, %s419
        %s421 = smul.u32 8, %s26
        %p422 = scmp.lt.s32.totalorder %s26, 1
        %s423 = scalar_select %p422, %s26, 1
        %s424 = smul.addr %s423, 8
        %s425 = scalar_lea.vmem %s11, %s424
        %v427 = vld [vmem:[%s413] sm:$0xf]
        %v428 = vld [vmem:[%s413 + $0x4] sm:$0xf]
        %v429 = vld [vmem:[%s413 + $0x8] sm:$0xf]
        %v430 = vld [vmem:[%s413 + $0xc] sm:$0xf]
        %v431 = vld [vmem:[%s413 + $0x10] sm:$0xf]
        %v432 = vld [vmem:[%s413 + $0x14] sm:$0xf]
        %v433 = vld [vmem:[%s413 + $0x18] sm:$0xf]
        %v434 = vld [vmem:[%s413 + $0x1c] sm:$0xf]
        %v435 = vld [vmem:[%s413 + $0x20] sm:$0xf]
        %v436 = vld [vmem:[%s413 + $0x24] sm:$0xf]
        %v437 = vld [vmem:[%s413 + $0x28] sm:$0xf]
        %v438 = vld [vmem:[%s413 + $0x2c] sm:$0xf]
        %v439 = vld [vmem:[%s413 + $0x30] sm:$0xf]
        %v440 = vld [vmem:[%s413 + $0x34] sm:$0xf]
        %v441 = vld [vmem:[%s413 + $0x38] sm:$0xf]
        %v442 = vld [vmem:[%s413 + $0x3c] sm:$0xf]
        %v443 = vld [vmem:[%s413 + $0x40] sm:$0xf]
        %v444 = vld [vmem:[%s413 + $0x44] sm:$0xf]
        %v445 = vld [vmem:[%s413 + $0x48] sm:$0xf]
        %v446 = vld [vmem:[%s413 + $0x4c] sm:$0xf]
        %v447 = vld [vmem:[%s413 + $0x50] sm:$0xf]
        %v448 = vld [vmem:[%s413 + $0x54] sm:$0xf]
        %v449 = vld [vmem:[%s413 + $0x58] sm:$0xf]
        %v450 = vld [vmem:[%s413 + $0x5c] sm:$0xf]
        %v451 = vld [vmem:[%s413 + $0x60] sm:$0xf]
        %v452 = vld [vmem:[%s413 + $0x64] sm:$0xf]
        %v453 = vld [vmem:[%s413 + $0x68] sm:$0xf]
        %v454 = vld [vmem:[%s413 + $0x6c] sm:$0xf]
        %v455 = vld [vmem:[%s413 + $0x70] sm:$0xf]
        %v456 = vld [vmem:[%s413 + $0x74] sm:$0xf]
        %v457 = vld [vmem:[%s413 + $0x78] sm:$0xf]
        %v458 = vld [vmem:[%s413 + $0x7c] sm:$0xf]
        %v459 = vld [vmem:[%s420] sm:$0xf]
        %v460 = vld [vmem:[%s420 + $0x4] sm:$0xf]
        %v461 = vld [vmem:[%s420 + $0x8] sm:$0xf]
        %v462 = vld [vmem:[%s420 + $0xc] sm:$0xf]
        %v463 = vld [vmem:[%s420 + $0x10] sm:$0xf]
        %v464 = vld [vmem:[%s420 + $0x14] sm:$0xf]
        %v465 = vld [vmem:[%s420 + $0x18] sm:$0xf]
        %v466 = vld [vmem:[%s420 + $0x1c] sm:$0xf]
        %v467 = vld [vmem:[%s420 + $0x20] sm:$0xf]
        %v468 = vld [vmem:[%s420 + $0x24] sm:$0xf]
        %v469 = vld [vmem:[%s420 + $0x28] sm:$0xf]
        %v470 = vld [vmem:[%s420 + $0x2c] sm:$0xf]
        %v471 = vld [vmem:[%s420 + $0x30] sm:$0xf]
        %v472 = vld [vmem:[%s420 + $0x34] sm:$0xf]
        %v473 = vld [vmem:[%s420 + $0x38] sm:$0xf]
        %v474 = vld [vmem:[%s420 + $0x3c] sm:$0xf]
        %v475 = vld [vmem:[%s420 + $0x40] sm:$0xf]
        %v476 = vld [vmem:[%s420 + $0x44] sm:$0xf]
        %v477 = vld [vmem:[%s420 + $0x48] sm:$0xf]
        %v478 = vld [vmem:[%s420 + $0x4c] sm:$0xf]
        %v479 = vld [vmem:[%s420 + $0x50] sm:$0xf]
        %v480 = vld [vmem:[%s420 + $0x54] sm:$0xf]
        %v481 = vld [vmem:[%s420 + $0x58] sm:$0xf]
        %v482 = vld [vmem:[%s420 + $0x5c] sm:$0xf]
        %v483 = vld [vmem:[%s420 + $0x60] sm:$0xf]
        %v484 = vld [vmem:[%s420 + $0x64] sm:$0xf]
        %v485 = vld [vmem:[%s420 + $0x68] sm:$0xf]
        %v486 = vld [vmem:[%s420 + $0x6c] sm:$0xf]
        %v487 = vld [vmem:[%s420 + $0x70] sm:$0xf]
        %v488 = vld [vmem:[%s420 + $0x74] sm:$0xf]
        %v489 = vld [vmem:[%s420 + $0x78] sm:$0xf]
        %v490 = vld [vmem:[%s420 + $0x7c] sm:$0xf]
        %v491 = vld [vmem:[%s2] sm:$0x3]
        %v524 = vunpack.c.l.b16 %v459
        %v525 = vunpack.c.l.b16 %v460
        %v526 = vunpack.c.l.b16 %v461
        %v527 = vunpack.c.l.b16 %v462
        %v528 = vunpack.c.l.b16 %v463
        %v529 = vunpack.c.l.b16 %v464
        %v530 = vunpack.c.l.b16 %v465
        %v531 = vunpack.c.l.b16 %v466
        %v532 = vunpack.c.l.b16 %v467
        %v533 = vunpack.c.l.b16 %v468
        %v534 = vunpack.c.l.b16 %v469
        %v535 = vunpack.c.l.b16 %v470
        %v536 = vunpack.c.l.b16 %v471
        %v537 = vunpack.c.l.b16 %v472
        %v538 = vunpack.c.l.b16 %v473
        %v539 = vunpack.c.l.b16 %v474
        %v540 = vunpack.c.l.b16 %v475
        %v541 = vunpack.c.l.b16 %v476
        %v542 = vunpack.c.l.b16 %v477
        %v543 = vunpack.c.l.b16 %v478
        %v544 = vunpack.c.l.b16 %v479
        %v545 = vunpack.c.l.b16 %v480
        %v546 = vunpack.c.l.b16 %v481
        %v547 = vunpack.c.l.b16 %v482
        %v548 = vunpack.c.l.b16 %v483
        %v549 = vunpack.c.l.b16 %v484
        %v550 = vunpack.c.l.b16 %v485
        %v551 = vunpack.c.l.b16 %v486
        %v552 = vunpack.c.l.b16 %v487
        %v553 = vunpack.c.l.b16 %v488
        %v554 = vunpack.c.l.b16 %v489
        %v555 = vunpack.c.l.b16 %v490
        %v556 = vpack.c.b16 %v525, %v524
        %v557 = vpack.c.b16 %v527, %v526
        %v558 = vpack.c.b16 %v529, %v528
        %v559 = vpack.c.b16 %v531, %v530
        %v560 = vpack.c.b16 %v533, %v532
        %v561 = vpack.c.b16 %v535, %v534
        %v562 = vpack.c.b16 %v537, %v536
        %v563 = vpack.c.b16 %v539, %v538
        %v564 = vpack.c.b16 %v541, %v540
        %v565 = vpack.c.b16 %v543, %v542
        %v566 = vpack.c.b16 %v545, %v544
        %v567 = vpack.c.b16 %v547, %v546
        %v568 = vpack.c.b16 %v549, %v548
        %v569 = vpack.c.b16 %v551, %v550
        %v570 = vpack.c.b16 %v553, %v552
        %v571 = vpack.c.b16 %v555, %v554
        %vm572 = vcmask 23552
        %v574 = vsel %vm572, %v556, 0
        %v577 = vsel %vm572, %v557, 0
        %v580 = vsel %vm572, %v558, 0
        %v583 = vsel %vm572, %v559, 0
        %v586 = vsel %vm572, %v560, 0
        %v589 = vsel %vm572, %v561, 0
        %v592 = vsel %vm572, %v562, 0
        %v595 = vsel %vm572, %v563, 0
        %v598 = vsel %vm572, %v564, 0
        %v601 = vsel %vm572, %v565, 0
        %v604 = vsel %vm572, %v566, 0
        %v607 = vsel %vm572, %v567, 0
        %v610 = vsel %vm572, %v568, 0
        %v613 = vsel %vm572, %v569, 0
        %v616 = vsel %vm572, %v570, 0
        %v619 = vsel %vm572, %v571, 0
        %vm621 = vcmask 1040384
        %vm622 = vcmask 1041408
        %v623 = vsel %vm621, 4294967295, 65535
        %v624 = vsel %vm622, %v623, 0
        %v626 = vand.u32 %v491, %v624
        %628 = vmatpush.bf16.msra.mxu0 0
        %629 = vmatpush.bf16.msra.mxu0 0
        %630 = vmatpush.bf16.msra.mxu0 0
        %631 = vmatpush.bf16.msra.mxu0 0
        %632 = vmatpush.bf16.msra.mxu0 0
        %633 = vmatpush.bf16.msra.mxu0 0
        %634 = vmatpush.bf16.msra.mxu0 0
        %635 = vmatpush.bf16.msra.mxu0 %v626
        %636 = vmatmul.bf16.gmra.mxu0 %v574
        %v637 = vpop.f32.mrf.mxu0
        %v638 = vadd.f32 0.0, %v637
        %v639 = vpop.f32.mrf.mxu0
        %v640 = vadd.f32 0.0, %v639
        %641 = vmatmul.bf16.gmra.mxu0 %v577
        %v642 = vpop.f32.mrf.mxu0
        %v643 = vadd.f32 0.0, %v642
        %v644 = vpop.f32.mrf.mxu0
        %v645 = vadd.f32 0.0, %v644
        %646 = vmatmul.bf16.gmra.mxu0 %v580
        %v647 = vpop.f32.mrf.mxu0
        %v648 = vadd.f32 0.0, %v647
        %v649 = vpop.f32.mrf.mxu0
        %v650 = vadd.f32 0.0, %v649
        %651 = vmatmul.bf16.gmra.mxu0 %v583
        %v652 = vpop.f32.mrf.mxu0
        %v653 = vadd.f32 0.0, %v652
        %v654 = vpop.f32.mrf.mxu0
        %v655 = vadd.f32 0.0, %v654
        %656 = vmatmul.bf16.gmra.mxu0 %v586
        %v657 = vpop.f32.mrf.mxu0
        %v658 = vadd.f32 0.0, %v657
        %v659 = vpop.f32.mrf.mxu0
        %v660 = vadd.f32 0.0, %v659
        %661 = vmatmul.bf16.gmra.mxu0 %v589
        %v662 = vpop.f32.mrf.mxu0
        %v663 = vadd.f32 0.0, %v662
        %v664 = vpop.f32.mrf.mxu0
        %v665 = vadd.f32 0.0, %v664
        %666 = vmatmul.bf16.gmra.mxu0 %v592
        %v667 = vpop.f32.mrf.mxu0
        %v668 = vadd.f32 0.0, %v667
        %v669 = vpop.f32.mrf.mxu0
        %v670 = vadd.f32 0.0, %v669
        %671 = vmatmul.bf16.gmra.mxu0 %v595
        %v672 = vpop.f32.mrf.mxu0
        %v673 = vadd.f32 0.0, %v672
        %v674 = vpop.f32.mrf.mxu0
        %v675 = vadd.f32 0.0, %v674
        %676 = vmatmul.bf16.gmra.mxu0 %v598
        %v677 = vpop.f32.mrf.mxu0
        %v678 = vadd.f32 0.0, %v677
        %v679 = vpop.f32.mrf.mxu0
        %v680 = vadd.f32 0.0, %v679
        %681 = vmatmul.bf16.gmra.mxu0 %v601
        %v682 = vpop.f32.mrf.mxu0
        %v683 = vadd.f32 0.0, %v682
        %v684 = vpop.f32.mrf.mxu0
        %v685 = vadd.f32 0.0, %v684
        %686 = vmatmul.bf16.gmra.mxu0 %v604
        %v687 = vpop.f32.mrf.mxu0
        %v688 = vadd.f32 0.0, %v687
        %v689 = vpop.f32.mrf.mxu0
        %v690 = vadd.f32 0.0, %v689
        %691 = vmatmul.bf16.gmra.mxu0 %v607
        %v692 = vpop.f32.mrf.mxu0
        %v693 = vadd.f32 0.0, %v692
        %v694 = vpop.f32.mrf.mxu0
        %v695 = vadd.f32 0.0, %v694
        %696 = vmatmul.bf16.gmra.mxu0 %v610
        %v697 = vpop.f32.mrf.mxu0
        %v698 = vadd.f32 0.0, %v697
        %v699 = vpop.f32.mrf.mxu0
        %v700 = vadd.f32 0.0, %v699
        %701 = vmatmul.bf16.gmra.mxu0 %v613
        %v702 = vpop.f32.mrf.mxu0
        %v703 = vadd.f32 0.0, %v702
        %v704 = vpop.f32.mrf.mxu0
        %v705 = vadd.f32 0.0, %v704
        %706 = vmatmul.bf16.gmra.mxu0 %v616
        %v707 = vpop.f32.mrf.mxu0
        %v708 = vadd.f32 0.0, %v707
        %v709 = vpop.f32.mrf.mxu0
        %v710 = vadd.f32 0.0, %v709
        %711 = vmatmul.bf16.gmra.mxu0 %v619
        %v712 = vpop.f32.mrf.mxu0
        %v713 = vadd.f32 0.0, %v712
        %v714 = vpop.f32.mrf.mxu0
        %v715 = vadd.f32 0.0, %v714
        %716 = vdwg.mxu0
        %v717 = vld [vmem:[%s3] sm:$0x3]
        %v719 = vand.u32 %v717, %v624
        %721 = vmatpush.bf16.msra.mxu0 0
        %722 = vmatpush.bf16.msra.mxu0 0
        %723 = vmatpush.bf16.msra.mxu0 0
        %724 = vmatpush.bf16.msra.mxu0 0
        %725 = vmatpush.bf16.msra.mxu0 0
        %726 = vmatpush.bf16.msra.mxu0 0
        %727 = vmatpush.bf16.msra.mxu0 0
        %728 = vmatpush.bf16.msra.mxu0 %v719
        %729 = vmatmul.bf16.gmra.mxu0 %v574
        %v730 = vpop.f32.mrf.mxu0
        %v731 = vadd.f32 0.0, %v730
        %v732 = vpop.f32.mrf.mxu0
        %v733 = vadd.f32 0.0, %v732
        %734 = vmatmul.bf16.gmra.mxu0 %v577
        %v735 = vpop.f32.mrf.mxu0
        %v736 = vadd.f32 0.0, %v735
        %v737 = vpop.f32.mrf.mxu0
        %v738 = vadd.f32 0.0, %v737
        %739 = vmatmul.bf16.gmra.mxu0 %v580
        %v740 = vpop.f32.mrf.mxu0
        %v741 = vadd.f32 0.0, %v740
        %v742 = vpop.f32.mrf.mxu0
        %v743 = vadd.f32 0.0, %v742
        %744 = vmatmul.bf16.gmra.mxu0 %v583
        %v745 = vpop.f32.mrf.mxu0
        %v746 = vadd.f32 0.0, %v745
        %v747 = vpop.f32.mrf.mxu0
        %v748 = vadd.f32 0.0, %v747
        %749 = vmatmul.bf16.gmra.mxu0 %v586
        %v750 = vpop.f32.mrf.mxu0
        %v751 = vadd.f32 0.0, %v750
        %v752 = vpop.f32.mrf.mxu0
        %v753 = vadd.f32 0.0, %v752
        %754 = vmatmul.bf16.gmra.mxu0 %v589
        %v755 = vpop.f32.mrf.mxu0
        %v756 = vadd.f32 0.0, %v755
        %v757 = vpop.f32.mrf.mxu0
        %v758 = vadd.f32 0.0, %v757
        %759 = vmatmul.bf16.gmra.mxu0 %v592
        %v760 = vpop.f32.mrf.mxu0
        %v761 = vadd.f32 0.0, %v760
        %v762 = vpop.f32.mrf.mxu0
        %v763 = vadd.f32 0.0, %v762
        %764 = vmatmul.bf16.gmra.mxu0 %v595
        %v765 = vpop.f32.mrf.mxu0
        %v766 = vadd.f32 0.0, %v765
        %v767 = vpop.f32.mrf.mxu0
        %v768 = vadd.f32 0.0, %v767
        %769 = vmatmul.bf16.gmra.mxu0 %v598
        %v770 = vpop.f32.mrf.mxu0
        %v771 = vadd.f32 0.0, %v770
        %v772 = vpop.f32.mrf.mxu0
        %v773 = vadd.f32 0.0, %v772
        %774 = vmatmul.bf16.gmra.mxu0 %v601
        %v775 = vpop.f32.mrf.mxu0
        %v776 = vadd.f32 0.0, %v775
        %v777 = vpop.f32.mrf.mxu0
        %v778 = vadd.f32 0.0, %v777
        %779 = vmatmul.bf16.gmra.mxu0 %v604
        %v780 = vpop.f32.mrf.mxu0
        %v781 = vadd.f32 0.0, %v780
        %v782 = vpop.f32.mrf.mxu0
        %v783 = vadd.f32 0.0, %v782
        %784 = vmatmul.bf16.gmra.mxu0 %v607
        %v785 = vpop.f32.mrf.mxu0
        %v786 = vadd.f32 0.0, %v785
        %v787 = vpop.f32.mrf.mxu0
        %v788 = vadd.f32 0.0, %v787
        %789 = vmatmul.bf16.gmra.mxu0 %v610
        %v790 = vpop.f32.mrf.mxu0
        %v791 = vadd.f32 0.0, %v790
        %v792 = vpop.f32.mrf.mxu0
        %v793 = vadd.f32 0.0, %v792
        %794 = vmatmul.bf16.gmra.mxu0 %v613
        %v795 = vpop.f32.mrf.mxu0
        %v796 = vadd.f32 0.0, %v795
        %v797 = vpop.f32.mrf.mxu0
        %v798 = vadd.f32 0.0, %v797
        %799 = vmatmul.bf16.gmra.mxu0 %v616
        %v800 = vpop.f32.mrf.mxu0
        %v801 = vadd.f32 0.0, %v800
        %v802 = vpop.f32.mrf.mxu0
        %v803 = vadd.f32 0.0, %v802
        %804 = vmatmul.bf16.gmra.mxu0 %v619
        %v805 = vpop.f32.mrf.mxu0
        %v806 = vadd.f32 0.0, %v805
        %v807 = vpop.f32.mrf.mxu0
        %v808 = vadd.f32 0.0, %v807
        %809 = vdwg.mxu0
        %v810 = vpack.c.bf16 %v638, %v638
        %v811 = vpack.c.bf16 %v640, %v640
        %v812 = vpack.c.bf16 %v643, %v643
        %v813 = vpack.c.bf16 %v645, %v645
        %v814 = vpack.c.bf16 %v648, %v648
        %v815 = vpack.c.bf16 %v650, %v650
        %v816 = vpack.c.bf16 %v653, %v653
        %v817 = vpack.c.bf16 %v655, %v655
        %v818 = vpack.c.bf16 %v658, %v658
        %v819 = vpack.c.bf16 %v660, %v660
        %v820 = vpack.c.bf16 %v663, %v663
        %v821 = vpack.c.bf16 %v665, %v665
        %v822 = vpack.c.bf16 %v668, %v668
        %v823 = vpack.c.bf16 %v670, %v670
        %v824 = vpack.c.bf16 %v673, %v673
        %v825 = vpack.c.bf16 %v675, %v675
        %v826 = vpack.c.bf16 %v678, %v678
        %v827 = vpack.c.bf16 %v680, %v680
        %v828 = vpack.c.bf16 %v683, %v683
        %v829 = vpack.c.bf16 %v685, %v685
        %v830 = vpack.c.bf16 %v688, %v688
        %v831 = vpack.c.bf16 %v690, %v690
        %v832 = vpack.c.bf16 %v693, %v693
        %v833 = vpack.c.bf16 %v695, %v695
        %v834 = vpack.c.bf16 %v698, %v698
        %v835 = vpack.c.bf16 %v700, %v700
        %v836 = vpack.c.bf16 %v703, %v703
        %v837 = vpack.c.bf16 %v705, %v705
        %v838 = vpack.c.bf16 %v708, %v708
        %v839 = vpack.c.bf16 %v710, %v710
        %v840 = vpack.c.bf16 %v713, %v713
        %v841 = vpack.c.bf16 %v715, %v715
        %v846 = vunpack.c.l.b16 %v427
        %v847 = vunpack.c.l.b16 %v428
        %v848 = vunpack.c.l.b16 %v429
        %v849 = vunpack.c.l.b16 %v430
        %v850 = vpack.c.b16 %v847, %v846
        %v851 = vpack.c.b16 %v849, %v848
        %v856 = vunpack.c.l.b16 %v810
        %v857 = vunpack.c.l.b16 %v811
        %v858 = vunpack.c.l.b16 %v812
        %v859 = vunpack.c.l.b16 %v813
        %v860 = vpack.c.b16 %v857, %v856
        %v861 = vpack.c.b16 %v859, %v858
        %vm864 = vcmask 261120
        %v866 = vsel %vm864, %v850, 0
        %v869 = vsel %vm864, %v851, 0
        %871 = vmatpush.bf16.msra.mxu0 0
        %872 = vmatpush.bf16.msra.mxu0 0
        %873 = vmatpush.bf16.msra.mxu0 0
        %874 = vmatpush.bf16.msra.mxu0 0
        %875 = vmatpush.bf16.msra.mxu0 0
        %876 = vmatpush.bf16.msra.mxu0 0
        %877 = vmatpush.bf16.msra.mxu0 %v861
        %878 = vmatpush.bf16.msra.mxu0 %v860
        %879 = vmatmul.bf16.gmra.mxu0 %v866
        %v880 = vpop.f32.mrf.mxu0
        %v881 = vadd.f32 %v731, %v880
        %v882 = vpop.f32.mrf.mxu0
        %v883 = vadd.f32 %v733, %v882
        %884 = vmatmul.bf16.gmra.mxu0 %v869
        %v885 = vpop.f32.mrf.mxu0
        %v886 = vadd.f32 %v736, %v885
        %v887 = vpop.f32.mrf.mxu0
        %v888 = vadd.f32 %v738, %v887
        %889 = vdwg.mxu0
        %v894 = vunpack.c.l.b16 %v431
        %v895 = vunpack.c.l.b16 %v432
        %v896 = vunpack.c.l.b16 %v433
        %v897 = vunpack.c.l.b16 %v434
        %v898 = vpack.c.b16 %v895, %v894
        %v899 = vpack.c.b16 %v897, %v896
        %v904 = vunpack.c.l.b16 %v814
        %v905 = vunpack.c.l.b16 %v815
        %v906 = vunpack.c.l.b16 %v816
        %v907 = vunpack.c.l.b16 %v817
        %v908 = vpack.c.b16 %v905, %v904
        %v909 = vpack.c.b16 %v907, %v906
        %v913 = vsel %vm864, %v898, 0
        %v916 = vsel %vm864, %v899, 0
        %918 = vmatpush.bf16.msra.mxu0 0
        %919 = vmatpush.bf16.msra.mxu0 0
        %920 = vmatpush.bf16.msra.mxu0 0
        %921 = vmatpush.bf16.msra.mxu0 0
        %922 = vmatpush.bf16.msra.mxu0 0
        %923 = vmatpush.bf16.msra.mxu0 0
        %924 = vmatpush.bf16.msra.mxu0 %v909
        %925 = vmatpush.bf16.msra.mxu0 %v908
        %926 = vmatmul.bf16.gmra.mxu0 %v913
        %v927 = vpop.f32.mrf.mxu0
        %v928 = vadd.f32 %v741, %v927
        %v929 = vpop.f32.mrf.mxu0
        %v930 = vadd.f32 %v743, %v929
        %931 = vmatmul.bf16.gmra.mxu0 %v916
        %v932 = vpop.f32.mrf.mxu0
        %v933 = vadd.f32 %v746, %v932
        %v934 = vpop.f32.mrf.mxu0
        %v935 = vadd.f32 %v748, %v934
        %936 = vdwg.mxu0
        %v941 = vunpack.c.l.b16 %v435
        %v942 = vunpack.c.l.b16 %v436
        %v943 = vunpack.c.l.b16 %v437
        %v944 = vunpack.c.l.b16 %v438
        %v945 = vpack.c.b16 %v942, %v941
        %v946 = vpack.c.b16 %v944, %v943
        %v951 = vunpack.c.l.b16 %v818
        %v952 = vunpack.c.l.b16 %v819
        %v953 = vunpack.c.l.b16 %v820
        %v954 = vunpack.c.l.b16 %v821
        %v955 = vpack.c.b16 %v952, %v951
        %v956 = vpack.c.b16 %v954, %v953
        %v960 = vsel %vm864, %v945, 0
        %v963 = vsel %vm864, %v946, 0
        %965 = vmatpush.bf16.msra.mxu0 0
        %966 = vmatpush.bf16.msra.mxu0 0
        %967 = vmatpush.bf16.msra.mxu0 0
        %968 = vmatpush.bf16.msra.mxu0 0
        %969 = vmatpush.bf16.msra.mxu0 0
        %970 = vmatpush.bf16.msra.mxu0 0
        %971 = vmatpush.bf16.msra.mxu0 %v956
        %972 = vmatpush.bf16.msra.mxu0 %v955
        %973 = vmatmul.bf16.gmra.mxu0 %v960
        %v974 = vpop.f32.mrf.mxu0
        %v975 = vadd.f32 %v751, %v974
        %v976 = vpop.f32.mrf.mxu0
        %v977 = vadd.f32 %v753, %v976
        %978 = vmatmul.bf16.gmra.mxu0 %v963
        %v979 = vpop.f32.mrf.mxu0
        %v980 = vadd.f32 %v756, %v979
        %v981 = vpop.f32.mrf.mxu0
        %v982 = vadd.f32 %v758, %v981
        %983 = vdwg.mxu0
        %v988 = vunpack.c.l.b16 %v439
        %v989 = vunpack.c.l.b16 %v440
        %v990 = vunpack.c.l.b16 %v441
        %v991 = vunpack.c.l.b16 %v442
        %v992 = vpack.c.b16 %v989, %v988
        %v993 = vpack.c.b16 %v991, %v990
        %v998 = vunpack.c.l.b16 %v822
        %v999 = vunpack.c.l.b16 %v823
        %v1000 = vunpack.c.l.b16 %v824
        %v1001 = vunpack.c.l.b16 %v825
        %v1002 = vpack.c.b16 %v999, %v998
        %v1003 = vpack.c.b16 %v1001, %v1000
        %v1007 = vsel %vm864, %v992, 0
        %v1010 = vsel %vm864, %v993, 0
        %1012 = vmatpush.bf16.msra.mxu0 0
        %1013 = vmatpush.bf16.msra.mxu0 0
        %1014 = vmatpush.bf16.msra.mxu0 0
        %1015 = vmatpush.bf16.msra.mxu0 0
        %1016 = vmatpush.bf16.msra.mxu0 0
        %1017 = vmatpush.bf16.msra.mxu0 0
        %1018 = vmatpush.bf16.msra.mxu0 %v1003
        %1019 = vmatpush.bf16.msra.mxu0 %v1002
        %1020 = vmatmul.bf16.gmra.mxu0 %v1007
        %v1021 = vpop.f32.mrf.mxu0
        %v1022 = vadd.f32 %v761, %v1021
        %v1023 = vpop.f32.mrf.mxu0
        %v1024 = vadd.f32 %v763, %v1023
        %1025 = vmatmul.bf16.gmra.mxu0 %v1010
        %v1026 = vpop.f32.mrf.mxu0
        %v1027 = vadd.f32 %v766, %v1026
        %v1028 = vpop.f32.mrf.mxu0
        %v1029 = vadd.f32 %v768, %v1028
        %1030 = vdwg.mxu0
        %v1035 = vunpack.c.l.b16 %v443
        %v1036 = vunpack.c.l.b16 %v444
        %v1037 = vunpack.c.l.b16 %v445
        %v1038 = vunpack.c.l.b16 %v446
        %v1039 = vpack.c.b16 %v1036, %v1035
        %v1040 = vpack.c.b16 %v1038, %v1037
        %v1045 = vunpack.c.l.b16 %v826
        %v1046 = vunpack.c.l.b16 %v827
        %v1047 = vunpack.c.l.b16 %v828
        %v1048 = vunpack.c.l.b16 %v829
        %v1049 = vpack.c.b16 %v1046, %v1045
        %v1050 = vpack.c.b16 %v1048, %v1047
        %v1054 = vsel %vm864, %v1039, 0
        %v1057 = vsel %vm864, %v1040, 0
        %1059 = vmatpush.bf16.msra.mxu0 0
        %1060 = vmatpush.bf16.msra.mxu0 0
        %1061 = vmatpush.bf16.msra.mxu0 0
        %1062 = vmatpush.bf16.msra.mxu0 0
        %1063 = vmatpush.bf16.msra.mxu0 0
        %1064 = vmatpush.bf16.msra.mxu0 0
        %1065 = vmatpush.bf16.msra.mxu0 %v1050
        %1066 = vmatpush.bf16.msra.mxu0 %v1049
        %1067 = vmatmul.bf16.gmra.mxu0 %v1054
        %v1068 = vpop.f32.mrf.mxu0
        %v1069 = vadd.f32 %v771, %v1068
        %v1070 = vpop.f32.mrf.mxu0
        %v1071 = vadd.f32 %v773, %v1070
        %1072 = vmatmul.bf16.gmra.mxu0 %v1057
        %v1073 = vpop.f32.mrf.mxu0
        %v1074 = vadd.f32 %v776, %v1073
        %v1075 = vpop.f32.mrf.mxu0
        %v1076 = vadd.f32 %v778, %v1075
        %1077 = vdwg.mxu0
        %v1082 = vunpack.c.l.b16 %v447
        %v1083 = vunpack.c.l.b16 %v448
        %v1084 = vunpack.c.l.b16 %v449
        %v1085 = vunpack.c.l.b16 %v450
        %v1086 = vpack.c.b16 %v1083, %v1082
        %v1087 = vpack.c.b16 %v1085, %v1084
        %v1092 = vunpack.c.l.b16 %v830
        %v1093 = vunpack.c.l.b16 %v831
        %v1094 = vunpack.c.l.b16 %v832
        %v1095 = vunpack.c.l.b16 %v833
        %v1096 = vpack.c.b16 %v1093, %v1092
        %v1097 = vpack.c.b16 %v1095, %v1094
        %v1101 = vsel %vm864, %v1086, 0
        %v1104 = vsel %vm864, %v1087, 0
        %1106 = vmatpush.bf16.msra.mxu0 0
        %1107 = vmatpush.bf16.msra.mxu0 0
        %1108 = vmatpush.bf16.msra.mxu0 0
        %1109 = vmatpush.bf16.msra.mxu0 0
        %1110 = vmatpush.bf16.msra.mxu0 0
        %1111 = vmatpush.bf16.msra.mxu0 0
        %1112 = vmatpush.bf16.msra.mxu0 %v1097
        %1113 = vmatpush.bf16.msra.mxu0 %v1096
        %1114 = vmatmul.bf16.gmra.mxu0 %v1101
        %v1115 = vpop.f32.mrf.mxu0
        %v1116 = vadd.f32 %v781, %v1115
        %v1117 = vpop.f32.mrf.mxu0
        %v1118 = vadd.f32 %v783, %v1117
        %1119 = vmatmul.bf16.gmra.mxu0 %v1104
        %v1120 = vpop.f32.mrf.mxu0
        %v1121 = vadd.f32 %v786, %v1120
        %v1122 = vpop.f32.mrf.mxu0
        %v1123 = vadd.f32 %v788, %v1122
        %1124 = vdwg.mxu0
        %v1129 = vunpack.c.l.b16 %v451
        %v1130 = vunpack.c.l.b16 %v452
        %v1131 = vunpack.c.l.b16 %v453
        %v1132 = vunpack.c.l.b16 %v454
        %v1133 = vpack.c.b16 %v1130, %v1129
        %v1134 = vpack.c.b16 %v1132, %v1131
        %v1139 = vunpack.c.l.b16 %v834
        %v1140 = vunpack.c.l.b16 %v835
        %v1141 = vunpack.c.l.b16 %v836
        %v1142 = vunpack.c.l.b16 %v837
        %v1143 = vpack.c.b16 %v1140, %v1139
        %v1144 = vpack.c.b16 %v1142, %v1141
        %v1148 = vsel %vm864, %v1133, 0
        %v1151 = vsel %vm864, %v1134, 0
        %1153 = vmatpush.bf16.msra.mxu0 0
        %1154 = vmatpush.bf16.msra.mxu0 0
        %1155 = vmatpush.bf16.msra.mxu0 0
        %1156 = vmatpush.bf16.msra.mxu0 0
        %1157 = vmatpush.bf16.msra.mxu0 0
        %1158 = vmatpush.bf16.msra.mxu0 0
        %1159 = vmatpush.bf16.msra.mxu0 %v1144
        %1160 = vmatpush.bf16.msra.mxu0 %v1143
        %1161 = vmatmul.bf16.gmra.mxu0 %v1148
        %v1162 = vpop.f32.mrf.mxu0
        %v1163 = vadd.f32 %v791, %v1162
        %v1164 = vpop.f32.mrf.mxu0
        %v1165 = vadd.f32 %v793, %v1164
        %1166 = vmatmul.bf16.gmra.mxu0 %v1151
        %v1167 = vpop.f32.mrf.mxu0
        %v1168 = vadd.f32 %v796, %v1167
        %v1169 = vpop.f32.mrf.mxu0
        %v1170 = vadd.f32 %v798, %v1169
        %1171 = vdwg.mxu0
        %v1176 = vunpack.c.l.b16 %v455
        %v1177 = vunpack.c.l.b16 %v456
        %v1178 = vunpack.c.l.b16 %v457
        %v1179 = vunpack.c.l.b16 %v458
        %v1180 = vpack.c.b16 %v1177, %v1176
        %v1181 = vpack.c.b16 %v1179, %v1178
        %v1186 = vunpack.c.l.b16 %v838
        %v1187 = vunpack.c.l.b16 %v839
        %v1188 = vunpack.c.l.b16 %v840
        %v1189 = vunpack.c.l.b16 %v841
        %v1190 = vpack.c.b16 %v1187, %v1186
        %v1191 = vpack.c.b16 %v1189, %v1188
        %v1195 = vsel %vm864, %v1180, 0
        %v1198 = vsel %vm864, %v1181, 0
        %1200 = vmatpush.bf16.msra.mxu0 0
        %1201 = vmatpush.bf16.msra.mxu0 0
        %1202 = vmatpush.bf16.msra.mxu0 0
        %1203 = vmatpush.bf16.msra.mxu0 0
        %1204 = vmatpush.bf16.msra.mxu0 0
        %1205 = vmatpush.bf16.msra.mxu0 0
        %1206 = vmatpush.bf16.msra.mxu0 %v1191
        %1207 = vmatpush.bf16.msra.mxu0 %v1190
        %1208 = vmatmul.bf16.gmra.mxu0 %v1195
        %v1209 = vpop.f32.mrf.mxu0
        %v1210 = vadd.f32 %v801, %v1209
        %v1211 = vpop.f32.mrf.mxu0
        %v1212 = vadd.f32 %v803, %v1211
        %1213 = vmatmul.bf16.gmra.mxu0 %v1198
        %v1214 = vpop.f32.mrf.mxu0
        %v1215 = vadd.f32 %v806, %v1214
        %v1216 = vpop.f32.mrf.mxu0
        %v1217 = vadd.f32 %v808, %v1216
        %1218 = vdwg.mxu0
        %v1219 = vld [vmem:[%s4] sm:$0x1]
        %v1221 = vperm.slane %v1219, 0
        %v1223 = vadd.f32 %v881, %v1221
        %v1224 = vadd.f32 %v883, %v1221
        %v1225 = vadd.f32 %v886, %v1221
        %v1226 = vadd.f32 %v888, %v1221
        %v1227 = vadd.f32 %v928, %v1221
        %v1228 = vadd.f32 %v930, %v1221
        %v1229 = vadd.f32 %v933, %v1221
        %v1230 = vadd.f32 %v935, %v1221
        %v1231 = vadd.f32 %v975, %v1221
        %v1232 = vadd.f32 %v977, %v1221
        %v1233 = vadd.f32 %v980, %v1221
        %v1234 = vadd.f32 %v982, %v1221
        %v1235 = vadd.f32 %v1022, %v1221
        %v1236 = vadd.f32 %v1024, %v1221
        %v1237 = vadd.f32 %v1027, %v1221
        %v1238 = vadd.f32 %v1029, %v1221
        %v1239 = vadd.f32 %v1069, %v1221
        %v1240 = vadd.f32 %v1071, %v1221
        %v1241 = vadd.f32 %v1074, %v1221
        %v1242 = vadd.f32 %v1076, %v1221
        %v1243 = vadd.f32 %v1116, %v1221
        %v1244 = vadd.f32 %v1118, %v1221
        %v1245 = vadd.f32 %v1121, %v1221
        %v1246 = vadd.f32 %v1123, %v1221
        %v1247 = vadd.f32 %v1163, %v1221
        %v1248 = vadd.f32 %v1165, %v1221
        %v1249 = vadd.f32 %v1168, %v1221
        %v1250 = vadd.f32 %v1170, %v1221
        %v1251 = vadd.f32 %v1210, %v1221
        %v1252 = vadd.f32 %v1212, %v1221
        %v1253 = vadd.f32 %v1215, %v1221
        %v1254 = vadd.f32 %v1217, %v1221
        %v1255 = vmax.f32 %v1223, 0.0
        %v1256 = vmax.f32 %v1224, 0.0
        %v1257 = vmax.f32 %v1225, 0.0
        %v1258 = vmax.f32 %v1226, 0.0
        %v1259 = vmax.f32 %v1227, 0.0
        %v1260 = vmax.f32 %v1228, 0.0
        %v1261 = vmax.f32 %v1229, 0.0
        %v1262 = vmax.f32 %v1230, 0.0
        %v1263 = vmax.f32 %v1231, 0.0
        %v1264 = vmax.f32 %v1232, 0.0
        %v1265 = vmax.f32 %v1233, 0.0
        %v1266 = vmax.f32 %v1234, 0.0
        %v1267 = vmax.f32 %v1235, 0.0
        %v1268 = vmax.f32 %v1236, 0.0
        %v1269 = vmax.f32 %v1237, 0.0
        %v1270 = vmax.f32 %v1238, 0.0
        %v1271 = vmax.f32 %v1239, 0.0
        %v1272 = vmax.f32 %v1240, 0.0
        %v1273 = vmax.f32 %v1241, 0.0
        %v1274 = vmax.f32 %v1242, 0.0
        %v1275 = vmax.f32 %v1243, 0.0
        %v1276 = vmax.f32 %v1244, 0.0
        %v1277 = vmax.f32 %v1245, 0.0
        %v1278 = vmax.f32 %v1246, 0.0
        %v1279 = vmax.f32 %v1247, 0.0
        %v1280 = vmax.f32 %v1248, 0.0
        %v1281 = vmax.f32 %v1249, 0.0
        %v1282 = vmax.f32 %v1250, 0.0
        %v1283 = vmax.f32 %v1251, 0.0
        %v1284 = vmax.f32 %v1252, 0.0
        %v1285 = vmax.f32 %v1253, 0.0
        %v1286 = vmax.f32 %v1254, 0.0
        %v1287 = vpack.c.bf16 %v1256, %v1255
        %v1288 = vpack.c.bf16 %v1258, %v1257
        %v1289 = vpack.c.bf16 %v1260, %v1259
        %v1290 = vpack.c.bf16 %v1262, %v1261
        %v1291 = vpack.c.bf16 %v1264, %v1263
        %v1292 = vpack.c.bf16 %v1266, %v1265
        %v1293 = vpack.c.bf16 %v1268, %v1267
        %v1294 = vpack.c.bf16 %v1270, %v1269
        %v1295 = vpack.c.bf16 %v1272, %v1271
        %v1296 = vpack.c.bf16 %v1274, %v1273
        %v1297 = vpack.c.bf16 %v1276, %v1275
        %v1298 = vpack.c.bf16 %v1278, %v1277
        %v1299 = vpack.c.bf16 %v1280, %v1279
        %v1300 = vpack.c.bf16 %v1282, %v1281
        %v1301 = vpack.c.bf16 %v1284, %v1283
        %v1302 = vpack.c.bf16 %v1286, %v1285
        %v1303 = vld [vmem:[%s5] sm:$0xf]
        %v1304 = vld [vmem:[%s5 + $0x4] sm:$0xf]
        %v1305 = vld [vmem:[%s5 + $0x8] sm:$0xf]
        %v1306 = vld [vmem:[%s5 + $0xc] sm:$0xf]
        %v1311 = vunpack.c.l.b16 %v1303
        %v1312 = vunpack.c.l.b16 %v1304
        %v1313 = vunpack.c.l.b16 %v1305
        %v1314 = vunpack.c.l.b16 %v1306
        %v1315 = vpack.c.b16 %v1312, %v1311
        %v1316 = vpack.c.b16 %v1314, %v1313
        %v1320 = vsel %vm864, %v1287, 0
        %v1323 = vsel %vm864, %v1288, 0
        %v1326 = vsel %vm864, %v1289, 0
        %v1329 = vsel %vm864, %v1290, 0
        %v1332 = vsel %vm864, %v1291, 0
        %v1335 = vsel %vm864, %v1292, 0
        %v1338 = vsel %vm864, %v1293, 0
        %v1341 = vsel %vm864, %v1294, 0
        %v1344 = vsel %vm864, %v1295, 0
        %v1347 = vsel %vm864, %v1296, 0
        %v1350 = vsel %vm864, %v1297, 0
        %v1353 = vsel %vm864, %v1298, 0
        %v1356 = vsel %vm864, %v1299, 0
        %v1359 = vsel %vm864, %v1300, 0
        %v1362 = vsel %vm864, %v1301, 0
        %v1365 = vsel %vm864, %v1302, 0
        %1367 = vmatpush.bf16.msra.mxu0 0
        %1368 = vmatpush.bf16.msra.mxu0 0
        %1369 = vmatpush.bf16.msra.mxu0 0
        %1370 = vmatpush.bf16.msra.mxu0 0
        %1371 = vmatpush.bf16.msra.mxu0 0
        %1372 = vmatpush.bf16.msra.mxu0 0
        %1373 = vmatpush.bf16.msra.mxu0 %v1316
        %1374 = vmatpush.bf16.msra.mxu0 %v1315
        %1375 = vmatmul.bf16.gmra.mxu0 %v1320
        %v1376 = vpop.f32.mrf.mxu0
        %v1377 = vadd.f32 0.0, %v1376
        %v1378 = vpop.f32.mrf.mxu0
        %v1379 = vadd.f32 0.0, %v1378
        %1380 = vmatmul.bf16.gmra.mxu0 %v1323
        %v1381 = vpop.f32.mrf.mxu0
        %v1382 = vadd.f32 0.0, %v1381
        %v1383 = vpop.f32.mrf.mxu0
        %v1384 = vadd.f32 0.0, %v1383
        %1385 = vmatmul.bf16.gmra.mxu0 %v1326
        %v1386 = vpop.f32.mrf.mxu0
        %v1387 = vadd.f32 0.0, %v1386
        %v1388 = vpop.f32.mrf.mxu0
        %v1389 = vadd.f32 0.0, %v1388
        %1390 = vmatmul.bf16.gmra.mxu0 %v1329
        %v1391 = vpop.f32.mrf.mxu0
        %v1392 = vadd.f32 0.0, %v1391
        %v1393 = vpop.f32.mrf.mxu0
        %v1394 = vadd.f32 0.0, %v1393
        %1395 = vmatmul.bf16.gmra.mxu0 %v1332
        %v1396 = vpop.f32.mrf.mxu0
        %v1397 = vadd.f32 0.0, %v1396
        %v1398 = vpop.f32.mrf.mxu0
        %v1399 = vadd.f32 0.0, %v1398
        %1400 = vmatmul.bf16.gmra.mxu0 %v1335
        %v1401 = vpop.f32.mrf.mxu0
        %v1402 = vadd.f32 0.0, %v1401
        %v1403 = vpop.f32.mrf.mxu0
        %v1404 = vadd.f32 0.0, %v1403
        %1405 = vmatmul.bf16.gmra.mxu0 %v1338
        %v1406 = vpop.f32.mrf.mxu0
        %v1407 = vadd.f32 0.0, %v1406
        %v1408 = vpop.f32.mrf.mxu0
        %v1409 = vadd.f32 0.0, %v1408
        %1410 = vmatmul.bf16.gmra.mxu0 %v1341
        %v1411 = vpop.f32.mrf.mxu0
        %v1412 = vadd.f32 0.0, %v1411
        %v1413 = vpop.f32.mrf.mxu0
        %v1414 = vadd.f32 0.0, %v1413
        %1415 = vmatmul.bf16.gmra.mxu0 %v1344
        %v1416 = vpop.f32.mrf.mxu0
        %v1417 = vadd.f32 0.0, %v1416
        %v1418 = vpop.f32.mrf.mxu0
        %v1419 = vadd.f32 0.0, %v1418
        %1420 = vmatmul.bf16.gmra.mxu0 %v1347
        %v1421 = vpop.f32.mrf.mxu0
        %v1422 = vadd.f32 0.0, %v1421
        %v1423 = vpop.f32.mrf.mxu0
        %v1424 = vadd.f32 0.0, %v1423
        %1425 = vmatmul.bf16.gmra.mxu0 %v1350
        %v1426 = vpop.f32.mrf.mxu0
        %v1427 = vadd.f32 0.0, %v1426
        %v1428 = vpop.f32.mrf.mxu0
        %v1429 = vadd.f32 0.0, %v1428
        %1430 = vmatmul.bf16.gmra.mxu0 %v1353
        %v1431 = vpop.f32.mrf.mxu0
        %v1432 = vadd.f32 0.0, %v1431
        %v1433 = vpop.f32.mrf.mxu0
        %v1434 = vadd.f32 0.0, %v1433
        %1435 = vmatmul.bf16.gmra.mxu0 %v1356
        %v1436 = vpop.f32.mrf.mxu0
        %v1437 = vadd.f32 0.0, %v1436
        %v1438 = vpop.f32.mrf.mxu0
        %v1439 = vadd.f32 0.0, %v1438
        %1440 = vmatmul.bf16.gmra.mxu0 %v1359
        %v1441 = vpop.f32.mrf.mxu0
        %v1442 = vadd.f32 0.0, %v1441
        %v1443 = vpop.f32.mrf.mxu0
        %v1444 = vadd.f32 0.0, %v1443
        %1445 = vmatmul.bf16.gmra.mxu0 %v1362
        %v1446 = vpop.f32.mrf.mxu0
        %v1447 = vadd.f32 0.0, %v1446
        %v1448 = vpop.f32.mrf.mxu0
        %v1449 = vadd.f32 0.0, %v1448
        %1450 = vmatmul.bf16.gmra.mxu0 %v1365
        %v1451 = vpop.f32.mrf.mxu0
        %v1452 = vadd.f32 0.0, %v1451
        %v1453 = vpop.f32.mrf.mxu0
        %v1454 = vadd.f32 0.0, %v1453
        %1455 = vdwg.mxu0
        %v1456 = vld [vmem:[%s6] sm:$0xf]
        %v1457 = vld [vmem:[%s6 + $0x4] sm:$0xf]
        %v1458 = vld [vmem:[%s6 + $0x8] sm:$0xf]
        %v1459 = vld [vmem:[%s6 + $0xc] sm:$0xf]
        %v1464 = vunpack.c.l.b16 %v1456
        %v1465 = vunpack.c.l.b16 %v1457
        %v1466 = vunpack.c.l.b16 %v1458
        %v1467 = vunpack.c.l.b16 %v1459
        %v1468 = vpack.c.b16 %v1465, %v1464
        %v1469 = vpack.c.b16 %v1467, %v1466
        %1472 = vmatpush.bf16.msra.mxu0 0
        %1473 = vmatpush.bf16.msra.mxu0 0
        %1474 = vmatpush.bf16.msra.mxu0 0
        %1475 = vmatpush.bf16.msra.mxu0 0
        %1476 = vmatpush.bf16.msra.mxu0 0
        %1477 = vmatpush.bf16.msra.mxu0 0
        %1478 = vmatpush.bf16.msra.mxu0 %v1469
        %1479 = vmatpush.bf16.msra.mxu0 %v1468
        %1480 = vmatmul.bf16.gmra.mxu0 %v1320
        %v1481 = vpop.f32.mrf.mxu0
        %v1482 = vadd.f32 0.0, %v1481
        %v1483 = vpop.f32.mrf.mxu0
        %v1484 = vadd.f32 0.0, %v1483
        %1485 = vmatmul.bf16.gmra.mxu0 %v1323
        %v1486 = vpop.f32.mrf.mxu0
        %v1487 = vadd.f32 0.0, %v1486
        %v1488 = vpop.f32.mrf.mxu0
        %v1489 = vadd.f32 0.0, %v1488
        %1490 = vmatmul.bf16.gmra.mxu0 %v1326
        %v1491 = vpop.f32.mrf.mxu0
        %v1492 = vadd.f32 0.0, %v1491
        %v1493 = vpop.f32.mrf.mxu0
        %v1494 = vadd.f32 0.0, %v1493
        %1495 = vmatmul.bf16.gmra.mxu0 %v1329
        %v1496 = vpop.f32.mrf.mxu0
        %v1497 = vadd.f32 0.0, %v1496
        %v1498 = vpop.f32.mrf.mxu0
        %v1499 = vadd.f32 0.0, %v1498
        %1500 = vmatmul.bf16.gmra.mxu0 %v1332
        %v1501 = vpop.f32.mrf.mxu0
        %v1502 = vadd.f32 0.0, %v1501
        %v1503 = vpop.f32.mrf.mxu0
        %v1504 = vadd.f32 0.0, %v1503
        %1505 = vmatmul.bf16.gmra.mxu0 %v1335
        %v1506 = vpop.f32.mrf.mxu0
        %v1507 = vadd.f32 0.0, %v1506
        %v1508 = vpop.f32.mrf.mxu0
        %v1509 = vadd.f32 0.0, %v1508
        %1510 = vmatmul.bf16.gmra.mxu0 %v1338
        %v1511 = vpop.f32.mrf.mxu0
        %v1512 = vadd.f32 0.0, %v1511
        %v1513 = vpop.f32.mrf.mxu0
        %v1514 = vadd.f32 0.0, %v1513
        %1515 = vmatmul.bf16.gmra.mxu0 %v1341
        %v1516 = vpop.f32.mrf.mxu0
        %v1517 = vadd.f32 0.0, %v1516
        %v1518 = vpop.f32.mrf.mxu0
        %v1519 = vadd.f32 0.0, %v1518
        %1520 = vmatmul.bf16.gmra.mxu0 %v1344
        %v1521 = vpop.f32.mrf.mxu0
        %v1522 = vadd.f32 0.0, %v1521
        %v1523 = vpop.f32.mrf.mxu0
        %v1524 = vadd.f32 0.0, %v1523
        %1525 = vmatmul.bf16.gmra.mxu0 %v1347
        %v1526 = vpop.f32.mrf.mxu0
        %v1527 = vadd.f32 0.0, %v1526
        %v1528 = vpop.f32.mrf.mxu0
        %v1529 = vadd.f32 0.0, %v1528
        %1530 = vmatmul.bf16.gmra.mxu0 %v1350
        %v1531 = vpop.f32.mrf.mxu0
        %v1532 = vadd.f32 0.0, %v1531
        %v1533 = vpop.f32.mrf.mxu0
        %v1534 = vadd.f32 0.0, %v1533
        %1535 = vmatmul.bf16.gmra.mxu0 %v1353
        %v1536 = vpop.f32.mrf.mxu0
        %v1537 = vadd.f32 0.0, %v1536
        %v1538 = vpop.f32.mrf.mxu0
        %v1539 = vadd.f32 0.0, %v1538
        %1540 = vmatmul.bf16.gmra.mxu0 %v1356
        %v1541 = vpop.f32.mrf.mxu0
        %v1542 = vadd.f32 0.0, %v1541
        %v1543 = vpop.f32.mrf.mxu0
        %v1544 = vadd.f32 0.0, %v1543
        %1545 = vmatmul.bf16.gmra.mxu0 %v1359
        %v1546 = vpop.f32.mrf.mxu0
        %v1547 = vadd.f32 0.0, %v1546
        %v1548 = vpop.f32.mrf.mxu0
        %v1549 = vadd.f32 0.0, %v1548
        %1550 = vmatmul.bf16.gmra.mxu0 %v1362
        %v1551 = vpop.f32.mrf.mxu0
        %v1552 = vadd.f32 0.0, %v1551
        %v1553 = vpop.f32.mrf.mxu0
        %v1554 = vadd.f32 0.0, %v1553
        %1555 = vmatmul.bf16.gmra.mxu0 %v1365
        %v1556 = vpop.f32.mrf.mxu0
        %v1557 = vadd.f32 0.0, %v1556
        %v1558 = vpop.f32.mrf.mxu0
        %v1559 = vadd.f32 0.0, %v1558
        %1560 = vdwg.mxu0
        %v1561 = vpack.c.bf16 %v1377, %v1377
        %v1562 = vpack.c.bf16 %v1379, %v1379
        %v1563 = vpack.c.bf16 %v1382, %v1382
        %v1564 = vpack.c.bf16 %v1384, %v1384
        %v1565 = vpack.c.bf16 %v1387, %v1387
        %v1566 = vpack.c.bf16 %v1389, %v1389
        %v1567 = vpack.c.bf16 %v1392, %v1392
        %v1568 = vpack.c.bf16 %v1394, %v1394
        %v1569 = vpack.c.bf16 %v1397, %v1397
        %v1570 = vpack.c.bf16 %v1399, %v1399
        %v1571 = vpack.c.bf16 %v1402, %v1402
        %v1572 = vpack.c.bf16 %v1404, %v1404
        %v1573 = vpack.c.bf16 %v1407, %v1407
        %v1574 = vpack.c.bf16 %v1409, %v1409
        %v1575 = vpack.c.bf16 %v1412, %v1412
        %v1576 = vpack.c.bf16 %v1414, %v1414
        %v1577 = vpack.c.bf16 %v1417, %v1417
        %v1578 = vpack.c.bf16 %v1419, %v1419
        %v1579 = vpack.c.bf16 %v1422, %v1422
        %v1580 = vpack.c.bf16 %v1424, %v1424
        %v1581 = vpack.c.bf16 %v1427, %v1427
        %v1582 = vpack.c.bf16 %v1429, %v1429
        %v1583 = vpack.c.bf16 %v1432, %v1432
        %v1584 = vpack.c.bf16 %v1434, %v1434
        %v1585 = vpack.c.bf16 %v1437, %v1437
        %v1586 = vpack.c.bf16 %v1439, %v1439
        %v1587 = vpack.c.bf16 %v1442, %v1442
        %v1588 = vpack.c.bf16 %v1444, %v1444
        %v1589 = vpack.c.bf16 %v1447, %v1447
        %v1590 = vpack.c.bf16 %v1449, %v1449
        %v1591 = vpack.c.bf16 %v1452, %v1452
        %v1592 = vpack.c.bf16 %v1454, %v1454
        %v1597 = vunpack.c.l.b16 %v1561
        %v1598 = vunpack.c.l.b16 %v1562
        %v1599 = vunpack.c.l.b16 %v1563
        %v1600 = vunpack.c.l.b16 %v1564
        %v1601 = vpack.c.b16 %v1598, %v1597
        %v1602 = vpack.c.b16 %v1600, %v1599
        %1605 = vmatpush.bf16.msra.mxu0 0
        %1606 = vmatpush.bf16.msra.mxu0 0
        %1607 = vmatpush.bf16.msra.mxu0 0
        %1608 = vmatpush.bf16.msra.mxu0 0
        %1609 = vmatpush.bf16.msra.mxu0 0
        %1610 = vmatpush.bf16.msra.mxu0 0
        %1611 = vmatpush.bf16.msra.mxu0 %v1602
        %1612 = vmatpush.bf16.msra.mxu0 %v1601
        %1613 = vmatmul.bf16.gmra.mxu0 %v866
        %v1614 = vpop.f32.mrf.mxu0
        %v1615 = vadd.f32 %v1482, %v1614
        %v1616 = vpop.f32.mrf.mxu0
        %v1617 = vadd.f32 %v1484, %v1616
        %1618 = vmatmul.bf16.gmra.mxu0 %v869
        %v1619 = vpop.f32.mrf.mxu0
        %v1620 = vadd.f32 %v1487, %v1619
        %v1621 = vpop.f32.mrf.mxu0
        %v1622 = vadd.f32 %v1489, %v1621
        %1623 = vdwg.mxu0
        %v1628 = vunpack.c.l.b16 %v1565
        %v1629 = vunpack.c.l.b16 %v1566
        %v1630 = vunpack.c.l.b16 %v1567
        %v1631 = vunpack.c.l.b16 %v1568
        %v1632 = vpack.c.b16 %v1629, %v1628
        %v1633 = vpack.c.b16 %v1631, %v1630
        %1636 = vmatpush.bf16.msra.mxu0 0
        %1637 = vmatpush.bf16.msra.mxu0 0
        %1638 = vmatpush.bf16.msra.mxu0 0
        %1639 = vmatpush.bf16.msra.mxu0 0
        %1640 = vmatpush.bf16.msra.mxu0 0
        %1641 = vmatpush.bf16.msra.mxu0 0
        %1642 = vmatpush.bf16.msra.mxu0 %v1633
        %1643 = vmatpush.bf16.msra.mxu0 %v1632
        %1644 = vmatmul.bf16.gmra.mxu0 %v913
        %v1645 = vpop.f32.mrf.mxu0
        %v1646 = vadd.f32 %v1492, %v1645
        %v1647 = vpop.f32.mrf.mxu0
        %v1648 = vadd.f32 %v1494, %v1647
        %1649 = vmatmul.bf16.gmra.mxu0 %v916
        %v1650 = vpop.f32.mrf.mxu0
        %v1651 = vadd.f32 %v1497, %v1650
        %v1652 = vpop.f32.mrf.mxu0
        %v1653 = vadd.f32 %v1499, %v1652
        %1654 = vdwg.mxu0
        %v1659 = vunpack.c.l.b16 %v1569
        %v1660 = vunpack.c.l.b16 %v1570
        %v1661 = vunpack.c.l.b16 %v1571
        %v1662 = vunpack.c.l.b16 %v1572
        %v1663 = vpack.c.b16 %v1660, %v1659
        %v1664 = vpack.c.b16 %v1662, %v1661
        %1667 = vmatpush.bf16.msra.mxu0 0
        %1668 = vmatpush.bf16.msra.mxu0 0
        %1669 = vmatpush.bf16.msra.mxu0 0
        %1670 = vmatpush.bf16.msra.mxu0 0
        %1671 = vmatpush.bf16.msra.mxu0 0
        %1672 = vmatpush.bf16.msra.mxu0 0
        %1673 = vmatpush.bf16.msra.mxu0 %v1664
        %1674 = vmatpush.bf16.msra.mxu0 %v1663
        %1675 = vmatmul.bf16.gmra.mxu0 %v960
        %v1676 = vpop.f32.mrf.mxu0
        %v1677 = vadd.f32 %v1502, %v1676
        %v1678 = vpop.f32.mrf.mxu0
        %v1679 = vadd.f32 %v1504, %v1678
        %1680 = vmatmul.bf16.gmra.mxu0 %v963
        %v1681 = vpop.f32.mrf.mxu0
        %v1682 = vadd.f32 %v1507, %v1681
        %v1683 = vpop.f32.mrf.mxu0
        %v1684 = vadd.f32 %v1509, %v1683
        %1685 = vdwg.mxu0
        %v1690 = vunpack.c.l.b16 %v1573
        %v1691 = vunpack.c.l.b16 %v1574
        %v1692 = vunpack.c.l.b16 %v1575
        %v1693 = vunpack.c.l.b16 %v1576
        %v1694 = vpack.c.b16 %v1691, %v1690
        %v1695 = vpack.c.b16 %v1693, %v1692
        %1698 = vmatpush.bf16.msra.mxu0 0
        %1699 = vmatpush.bf16.msra.mxu0 0
        %1700 = vmatpush.bf16.msra.mxu0 0
        %1701 = vmatpush.bf16.msra.mxu0 0
        %1702 = vmatpush.bf16.msra.mxu0 0
        %1703 = vmatpush.bf16.msra.mxu0 0
        %1704 = vmatpush.bf16.msra.mxu0 %v1695
        %1705 = vmatpush.bf16.msra.mxu0 %v1694
        %1706 = vmatmul.bf16.gmra.mxu0 %v1007
        %v1707 = vpop.f32.mrf.mxu0
        %v1708 = vadd.f32 %v1512, %v1707
        %v1709 = vpop.f32.mrf.mxu0
        %v1710 = vadd.f32 %v1514, %v1709
        %1711 = vmatmul.bf16.gmra.mxu0 %v1010
        %v1712 = vpop.f32.mrf.mxu0
        %v1713 = vadd.f32 %v1517, %v1712
        %v1714 = vpop.f32.mrf.mxu0
        %v1715 = vadd.f32 %v1519, %v1714
        %1716 = vdwg.mxu0
        %v1721 = vunpack.c.l.b16 %v1577
        %v1722 = vunpack.c.l.b16 %v1578
        %v1723 = vunpack.c.l.b16 %v1579
        %v1724 = vunpack.c.l.b16 %v1580
        %v1725 = vpack.c.b16 %v1722, %v1721
        %v1726 = vpack.c.b16 %v1724, %v1723
        %1729 = vmatpush.bf16.msra.mxu0 0
        %1730 = vmatpush.bf16.msra.mxu0 0
        %1731 = vmatpush.bf16.msra.mxu0 0
        %1732 = vmatpush.bf16.msra.mxu0 0
        %1733 = vmatpush.bf16.msra.mxu0 0
        %1734 = vmatpush.bf16.msra.mxu0 0
        %1735 = vmatpush.bf16.msra.mxu0 %v1726
        %1736 = vmatpush.bf16.msra.mxu0 %v1725
        %1737 = vmatmul.bf16.gmra.mxu0 %v1054
        %v1738 = vpop.f32.mrf.mxu0
        %v1739 = vadd.f32 %v1522, %v1738
        %v1740 = vpop.f32.mrf.mxu0
        %v1741 = vadd.f32 %v1524, %v1740
        %1742 = vmatmul.bf16.gmra.mxu0 %v1057
        %v1743 = vpop.f32.mrf.mxu0
        %v1744 = vadd.f32 %v1527, %v1743
        %v1745 = vpop.f32.mrf.mxu0
        %v1746 = vadd.f32 %v1529, %v1745
        %1747 = vdwg.mxu0
        %v1752 = vunpack.c.l.b16 %v1581
        %v1753 = vunpack.c.l.b16 %v1582
        %v1754 = vunpack.c.l.b16 %v1583
        %v1755 = vunpack.c.l.b16 %v1584
        %v1756 = vpack.c.b16 %v1753, %v1752
        %v1757 = vpack.c.b16 %v1755, %v1754
        %1760 = vmatpush.bf16.msra.mxu0 0
        %1761 = vmatpush.bf16.msra.mxu0 0
        %1762 = vmatpush.bf16.msra.mxu0 0
        %1763 = vmatpush.bf16.msra.mxu0 0
        %1764 = vmatpush.bf16.msra.mxu0 0
        %1765 = vmatpush.bf16.msra.mxu0 0
        %1766 = vmatpush.bf16.msra.mxu0 %v1757
        %1767 = vmatpush.bf16.msra.mxu0 %v1756
        %1768 = vmatmul.bf16.gmra.mxu0 %v1101
        %v1769 = vpop.f32.mrf.mxu0
        %v1770 = vadd.f32 %v1532, %v1769
        %v1771 = vpop.f32.mrf.mxu0
        %v1772 = vadd.f32 %v1534, %v1771
        %1773 = vmatmul.bf16.gmra.mxu0 %v1104
        %v1774 = vpop.f32.mrf.mxu0
        %v1775 = vadd.f32 %v1537, %v1774
        %v1776 = vpop.f32.mrf.mxu0
        %v1777 = vadd.f32 %v1539, %v1776
        %1778 = vdwg.mxu0
        %v1783 = vunpack.c.l.b16 %v1585
        %v1784 = vunpack.c.l.b16 %v1586
        %v1785 = vunpack.c.l.b16 %v1587
        %v1786 = vunpack.c.l.b16 %v1588
        %v1787 = vpack.c.b16 %v1784, %v1783
        %v1788 = vpack.c.b16 %v1786, %v1785
        %1791 = vmatpush.bf16.msra.mxu0 0
        %1792 = vmatpush.bf16.msra.mxu0 0
        %1793 = vmatpush.bf16.msra.mxu0 0
        %1794 = vmatpush.bf16.msra.mxu0 0
        %1795 = vmatpush.bf16.msra.mxu0 0
        %1796 = vmatpush.bf16.msra.mxu0 0
        %1797 = vmatpush.bf16.msra.mxu0 %v1788
        %1798 = vmatpush.bf16.msra.mxu0 %v1787
        %1799 = vmatmul.bf16.gmra.mxu0 %v1148
        %v1800 = vpop.f32.mrf.mxu0
        %v1801 = vadd.f32 %v1542, %v1800
        %v1802 = vpop.f32.mrf.mxu0
        %v1803 = vadd.f32 %v1544, %v1802
        %1804 = vmatmul.bf16.gmra.mxu0 %v1151
        %v1805 = vpop.f32.mrf.mxu0
        %v1806 = vadd.f32 %v1547, %v1805
        %v1807 = vpop.f32.mrf.mxu0
        %v1808 = vadd.f32 %v1549, %v1807
        %1809 = vdwg.mxu0
        %v1814 = vunpack.c.l.b16 %v1589
        %v1815 = vunpack.c.l.b16 %v1590
        %v1816 = vunpack.c.l.b16 %v1591
        %v1817 = vunpack.c.l.b16 %v1592
        %v1818 = vpack.c.b16 %v1815, %v1814
        %v1819 = vpack.c.b16 %v1817, %v1816
        %1822 = vmatpush.bf16.msra.mxu0 0
        %1823 = vmatpush.bf16.msra.mxu0 0
        %1824 = vmatpush.bf16.msra.mxu0 0
        %1825 = vmatpush.bf16.msra.mxu0 0
        %1826 = vmatpush.bf16.msra.mxu0 0
        %1827 = vmatpush.bf16.msra.mxu0 0
        %1828 = vmatpush.bf16.msra.mxu0 %v1819
        %1829 = vmatpush.bf16.msra.mxu0 %v1818
        %1830 = vmatmul.bf16.gmra.mxu0 %v1195
        %v1831 = vpop.f32.mrf.mxu0
        %v1832 = vadd.f32 %v1552, %v1831
        %v1833 = vpop.f32.mrf.mxu0
        %v1834 = vadd.f32 %v1554, %v1833
        %1835 = vmatmul.bf16.gmra.mxu0 %v1198
        %v1836 = vpop.f32.mrf.mxu0
        %v1837 = vadd.f32 %v1557, %v1836
        %v1838 = vpop.f32.mrf.mxu0
        %v1839 = vadd.f32 %v1559, %v1838
        %1840 = vdwg.mxu0
        %v1841 = vld [vmem:[%s7] sm:$0x1]
        %v1843 = vperm.slane %v1841, 0
        %v1845 = vadd.f32 %v1615, %v1843
        %v1846 = vadd.f32 %v1617, %v1843
        %v1847 = vadd.f32 %v1620, %v1843
        %v1848 = vadd.f32 %v1622, %v1843
        %v1849 = vadd.f32 %v1646, %v1843
        %v1850 = vadd.f32 %v1648, %v1843
        %v1851 = vadd.f32 %v1651, %v1843
        %v1852 = vadd.f32 %v1653, %v1843
        %v1853 = vadd.f32 %v1677, %v1843
        %v1854 = vadd.f32 %v1679, %v1843
        %v1855 = vadd.f32 %v1682, %v1843
        %v1856 = vadd.f32 %v1684, %v1843
        %v1857 = vadd.f32 %v1708, %v1843
        %v1858 = vadd.f32 %v1710, %v1843
        %v1859 = vadd.f32 %v1713, %v1843
        %v1860 = vadd.f32 %v1715, %v1843
        %v1861 = vadd.f32 %v1739, %v1843
        %v1862 = vadd.f32 %v1741, %v1843
        %v1863 = vadd.f32 %v1744, %v1843
        %v1864 = vadd.f32 %v1746, %v1843
        %v1865 = vadd.f32 %v1770, %v1843
        %v1866 = vadd.f32 %v1772, %v1843
        %v1867 = vadd.f32 %v1775, %v1843
        %v1868 = vadd.f32 %v1777, %v1843
        %v1869 = vadd.f32 %v1801, %v1843
        %v1870 = vadd.f32 %v1803, %v1843
        %v1871 = vadd.f32 %v1806, %v1843
        %v1872 = vadd.f32 %v1808, %v1843
        %v1873 = vadd.f32 %v1832, %v1843
        %v1874 = vadd.f32 %v1834, %v1843
        %v1875 = vadd.f32 %v1837, %v1843
        %v1876 = vadd.f32 %v1839, %v1843
        %v1877 = vmax.f32 %v1845, 0.0
        %v1878 = vmax.f32 %v1846, 0.0
        %v1879 = vmax.f32 %v1847, 0.0
        %v1880 = vmax.f32 %v1848, 0.0
        %v1881 = vmax.f32 %v1849, 0.0
        %v1882 = vmax.f32 %v1850, 0.0
        %v1883 = vmax.f32 %v1851, 0.0
        %v1884 = vmax.f32 %v1852, 0.0
        %v1885 = vmax.f32 %v1853, 0.0
        %v1886 = vmax.f32 %v1854, 0.0
        %v1887 = vmax.f32 %v1855, 0.0
        %v1888 = vmax.f32 %v1856, 0.0
        %v1889 = vmax.f32 %v1857, 0.0
        %v1890 = vmax.f32 %v1858, 0.0
        %v1891 = vmax.f32 %v1859, 0.0
        %v1892 = vmax.f32 %v1860, 0.0
        %v1893 = vmax.f32 %v1861, 0.0
        %v1894 = vmax.f32 %v1862, 0.0
        %v1895 = vmax.f32 %v1863, 0.0
        %v1896 = vmax.f32 %v1864, 0.0
        %v1897 = vmax.f32 %v1865, 0.0
        %v1898 = vmax.f32 %v1866, 0.0
        %v1899 = vmax.f32 %v1867, 0.0
        %v1900 = vmax.f32 %v1868, 0.0
        %v1901 = vmax.f32 %v1869, 0.0
        %v1902 = vmax.f32 %v1870, 0.0
        %v1903 = vmax.f32 %v1871, 0.0
        %v1904 = vmax.f32 %v1872, 0.0
        %v1905 = vmax.f32 %v1873, 0.0
        %v1906 = vmax.f32 %v1874, 0.0
        %v1907 = vmax.f32 %v1875, 0.0
        %v1908 = vmax.f32 %v1876, 0.0
        %vm1909 = vcmask 130048
        %v1910 = vsel %vm1909, %v1877, 0.0
        %v1911 = vsel %vm1909, %v1878, 0.0
        %v1912 = vadd.f32 %v1910, %v1911
        %v1913 = vsel %vm1909, %v1879, 0.0
        %v1914 = vadd.f32 %v1912, %v1913
        %v1915 = vsel %vm1909, %v1880, 0.0
        %v1916 = vadd.f32 %v1914, %v1915
        %v1917 = vrot.slane %v1916, 4
        %v1918 = vadd.f32 %v1916, %v1917
        %v1919 = vrot.slane %v1918, 2
        %v1920 = vadd.f32 %v1918, %v1919
        %v1921 = vrot.slane %v1920, 1
        %v1922 = vadd.f32 %v1920, %v1921
        %v1923 = vsel %vm1909, %v1881, 0.0
        %v1924 = vsel %vm1909, %v1882, 0.0
        %v1925 = vadd.f32 %v1923, %v1924
        %v1926 = vsel %vm1909, %v1883, 0.0
        %v1927 = vadd.f32 %v1925, %v1926
        %v1928 = vsel %vm1909, %v1884, 0.0
        %v1929 = vadd.f32 %v1927, %v1928
        %v1930 = vrot.slane %v1929, 4
        %v1931 = vadd.f32 %v1929, %v1930
        %v1932 = vrot.slane %v1931, 2
        %v1933 = vadd.f32 %v1931, %v1932
        %v1934 = vrot.slane %v1933, 1
        %v1935 = vadd.f32 %v1933, %v1934
        %v1936 = vsel %vm1909, %v1885, 0.0
        %v1937 = vsel %vm1909, %v1886, 0.0
        %v1938 = vadd.f32 %v1936, %v1937
        %v1939 = vsel %vm1909, %v1887, 0.0
        %v1940 = vadd.f32 %v1938, %v1939
        %v1941 = vsel %vm1909, %v1888, 0.0
        %v1942 = vadd.f32 %v1940, %v1941
        %v1943 = vrot.slane %v1942, 4
        %v1944 = vadd.f32 %v1942, %v1943
        %v1945 = vrot.slane %v1944, 2
        %v1946 = vadd.f32 %v1944, %v1945
        %v1947 = vrot.slane %v1946, 1
        %v1948 = vadd.f32 %v1946, %v1947
        %v1949 = vsel %vm1909, %v1889, 0.0
        %v1950 = vsel %vm1909, %v1890, 0.0
        %v1951 = vadd.f32 %v1949, %v1950
        %v1952 = vsel %vm1909, %v1891, 0.0
        %v1953 = vadd.f32 %v1951, %v1952
        %v1954 = vsel %vm1909, %v1892, 0.0
        %v1955 = vadd.f32 %v1953, %v1954
        %v1956 = vrot.slane %v1955, 4
        %v1957 = vadd.f32 %v1955, %v1956
        %v1958 = vrot.slane %v1957, 2
        %v1959 = vadd.f32 %v1957, %v1958
        %v1960 = vrot.slane %v1959, 1
        %v1961 = vadd.f32 %v1959, %v1960
        %v1962 = vsel %vm1909, %v1893, 0.0
        %v1963 = vsel %vm1909, %v1894, 0.0
        %v1964 = vadd.f32 %v1962, %v1963
        %v1965 = vsel %vm1909, %v1895, 0.0
        %v1966 = vadd.f32 %v1964, %v1965
        %v1967 = vsel %vm1909, %v1896, 0.0
        %v1968 = vadd.f32 %v1966, %v1967
        %v1969 = vrot.slane %v1968, 4
        %v1970 = vadd.f32 %v1968, %v1969
        %v1971 = vrot.slane %v1970, 2
        %v1972 = vadd.f32 %v1970, %v1971
        %v1973 = vrot.slane %v1972, 1
        %v1974 = vadd.f32 %v1972, %v1973
        %v1975 = vsel %vm1909, %v1897, 0.0
        %v1976 = vsel %vm1909, %v1898, 0.0
        %v1977 = vadd.f32 %v1975, %v1976
        %v1978 = vsel %vm1909, %v1899, 0.0
        %v1979 = vadd.f32 %v1977, %v1978
        %v1980 = vsel %vm1909, %v1900, 0.0
        %v1981 = vadd.f32 %v1979, %v1980
        %v1982 = vrot.slane %v1981, 4
        %v1983 = vadd.f32 %v1981, %v1982
        %v1984 = vrot.slane %v1983, 2
        %v1985 = vadd.f32 %v1983, %v1984
        %v1986 = vrot.slane %v1985, 1
        %v1987 = vadd.f32 %v1985, %v1986
        %v1988 = vsel %vm1909, %v1901, 0.0
        %v1989 = vsel %vm1909, %v1902, 0.0
        %v1990 = vadd.f32 %v1988, %v1989
        %v1991 = vsel %vm1909, %v1903, 0.0
        %v1992 = vadd.f32 %v1990, %v1991
        %v1993 = vsel %vm1909, %v1904, 0.0
        %v1994 = vadd.f32 %v1992, %v1993
        %v1995 = vrot.slane %v1994, 4
        %v1996 = vadd.f32 %v1994, %v1995
        %v1997 = vrot.slane %v1996, 2
        %v1998 = vadd.f32 %v1996, %v1997
        %v1999 = vrot.slane %v1998, 1
        %v2000 = vadd.f32 %v1998, %v1999
        %v2001 = vsel %vm1909, %v1905, 0.0
        %v2002 = vsel %vm1909, %v1906, 0.0
        %v2003 = vadd.f32 %v2001, %v2002
        %v2004 = vsel %vm1909, %v1907, 0.0
        %v2005 = vadd.f32 %v2003, %v2004
        %v2006 = vsel %vm1909, %v1908, 0.0
        %v2007 = vadd.f32 %v2005, %v2006
        %v2008 = vrot.slane %v2007, 4
        %v2009 = vadd.f32 %v2007, %v2008
        %v2010 = vrot.slane %v2009, 2
        %v2011 = vadd.f32 %v2009, %v2010
        %v2012 = vrot.slane %v2011, 1
        %v2013 = vadd.f32 %v2011, %v2012
        %v2014 = vmul.f32 %v1922, 0.03125
        %v2015 = vmul.f32 %v1935, 0.03125
        %v2016 = vmul.f32 %v1948, 0.03125
        %v2017 = vmul.f32 %v1961, 0.03125
        %v2018 = vmul.f32 %v1974, 0.03125
        %v2019 = vmul.f32 %v1987, 0.03125
        %v2020 = vmul.f32 %v2000, 0.03125
        %v2021 = vmul.f32 %v2013, 0.03125
        %v2022 = vpack.c.bf16 %v2014, %v2014
        %v2023 = vpack.c.bf16 %v2015, %v2015
        %v2024 = vpack.c.bf16 %v2016, %v2016
        %v2025 = vpack.c.bf16 %v2017, %v2017
        %v2026 = vpack.c.bf16 %v2018, %v2018
        %v2027 = vpack.c.bf16 %v2019, %v2019
        %v2028 = vpack.c.bf16 %v2020, %v2020
        %v2029 = vpack.c.bf16 %v2021, %v2021
        %v2030 = vld [vmem:[%s8] sm:$0xf]
        %v2031 = vld [vmem:[%s8 + $0x4] sm:$0xf]
        %v2032 = vld [vmem:[%s9] sm:$0x1]
        %v2034 = vperm.slane %v2032, 0
        %v2044 = vunpack.c.l.b16 %v2022
        %v2045 = vunpack.c.l.b16 %v2023
        %v2046 = vunpack.c.l.b16 %v2024
        %v2047 = vunpack.c.l.b16 %v2025
        %v2048 = vunpack.c.l.b16 %v2026
        %v2049 = vunpack.c.l.b16 %v2027
        %v2050 = vunpack.c.l.b16 %v2028
        %v2051 = vunpack.c.l.b16 %v2029
        %vm2052 = vcmask 1041409
        %v2053 = vsel %vm2052, %v2045, %v2044
        %vm2054 = vcmask 1042434
        %v2055 = vsel %vm2054, %v2046, %v2053
        %vm2056 = vcmask 1043459
        %v2057 = vsel %vm2056, %v2047, %v2055
        %vm2058 = vcmask 1044484
        %v2059 = vsel %vm2058, %v2048, %v2057
        %vm2060 = vcmask 1045509
        %v2061 = vsel %vm2060, %v2049, %v2059
        %vm2062 = vcmask 1046534
        %v2063 = vsel %vm2062, %v2050, %v2061
        %vm2064 = vcmask 1047559
        %v2065 = vsel %vm2064, %v2051, %v2063
        %v2066 = vpack.c.b16 %v2065, %v2065
        %v2069 = vunpack.c.l.b16 %v2030
        %v2070 = vunpack.c.l.b16 %v2031
        %v2071 = vpack.c.b16 %v2070, %v2069
        %v2074 = vsel %vm1909, %v2066, 0
        %2076 = vmatpush.bf16.msra.mxu0 0
        %2077 = vmatpush.bf16.msra.mxu0 0
        %2078 = vmatpush.bf16.msra.mxu0 0
        %2079 = vmatpush.bf16.msra.mxu0 0
        %2080 = vmatpush.bf16.msra.mxu0 0
        %2081 = vmatpush.bf16.msra.mxu0 0
        %2082 = vmatpush.bf16.msra.mxu0 0
        %2083 = vmatpush.bf16.msra.mxu0 %v2071
        %2084 = vmatmul.bf16.gmra.mxu0 %v2074
        %v2085 = vpop.f32.mrf.mxu0
        %v2086 = vadd.f32 %v2034, %v2085
        %v2087 = vpop.f32.mrf.mxu0
        %2088 = vdwg.mxu0
        %v2089 = vlaneseq
        %v2090 = vand.u32 %v2089, 127
        %2091 = vmax.xlane.f32.xlu0 %v2086
        %v2092 = vpop.xlane.xlu0 %2091
        %vm2093 = vcmp.ge.f32.partialorder %v2086, %v2092
        %v2094 = vsel %vm2093, %v2090, 128
        %v2095 = vand.u32 %v2094, 65535
        %v2096 = vshra.s32 %v2094, 16
        %v2097 = vcvt.s32.f32 %v2095
        %v2098 = vcvt.s32.f32 %v2096
        %2099 = vmin.xlane.f32.xlu0 %v2098
        %v2100 = vpop.xlane.xlu0 %2099
        %vm2101 = vcmp.eq.f32.partialorder %v2098, %v2100
        %v2102 = vsel %vm2101, %v2097, inf
        %2103 = vmin.xlane.f32.xlu0 %v2102
        %v2104 = vpop.xlane.xlu0 %2103
        %v2105 = vcvt.f32.s32 %v2104
        %v2106 = vcvt.f32.s32 %v2100
        %v2107 = vshll.u32 %v2106, 16
        %v2108 = vadd.s32 %v2107, %v2105
        %vm2109 = vcmask 7168
        %2110 = vst.msk [vmem:[%s425] sm:$0xff] %vm2109, %v2108
        %v2111 = vsub.f32 %v2086, %v2092
        %v2112 = vmul.f32 %v2111, 1.442695
        %v2113 = vpow.pop %v2112
        %2114 = vadd.xlane.f32.xlu0 %v2113
        %v2115 = vpop.xlane.xlu0 %2114
        %v2116 = vrcp.pop %v2115
        %v2117 = vmul.f32 %v2115, %v2116
        %v2118 = vsub.f32 1.0, %v2117
        %v2119 = vmul.f32 %v2116, %v2118
        %v2120 = vadd.f32 %v2116, %v2119
        %vm2121 = vweird.f32 %v2115
        %vm2122 = vweird.f32 %v2116
        %vm2123 = vmor %vm2121, %vm2122
        %v2124 = vsel %vm2123, %v2116, %v2120
        %v2125 = vand.u32 2147483647, %v2115
        %vm2126 = vcmp.eq.f32.partialorder %v2125, 8.507059e+37
        %v2127 = vand.u32 %v2115, 2147483648
        %v2128 = vor.u32 1.1754944e-38, %v2127
        %v2129 = vsel %vm2126, %v2128, %v2124
        %v2130 = vmul.f32 %v2113, %v2129
        %2131 = vst [vmem:[%s401] sm:$0xff] %v2130
        %s2132 = sand.u32 %s254, 1
        %s2133 = scalar_lea.sflag [#allocation3], %s2132
        %s2134 = sand.u32 %s254, 1
        %s2135 = smul.addr %s2134, 8
        %s2136 = scalar_lea.vmem [#allocation2], %s2135
        %p2137 = scmp.lt.s32.totalorder %s26, 1
        %s2138 = scalar_select %p2137, %s26, 1
        %s2139 = smul.addr %s2138, 8
        %s2140 = scalar_lea.vmem %s11, %s2139
        // Predicated region
        $region61: #{gnn_forward.1} parent=59 // pred_check
          %p2141 = pneg %p264
        $region62: #{gnn_forward.1} parent=59 // pred_check_branch
          %2143 = sbr.rel (%p2141) target = $region64
        $region63: #{gnn_forward.1} parent=59 // pred_region
          %2145 = vsyncadd %s2133, 0
          %s2146 = smul.addr %s26, 8
          %s2147 = scalar_lea.hbm %s10, %s2146
          %s2149 = sshll.u32 %s2136, 4
          %s2150 = int_to_ptr.vmem [resolvable:$true] %s2149
          %s2151 = sshll.u32 %s2147, 4
          %s2152 = int_to_ptr.hbm [resolvable:$true] %s2151
          %2154 = dma.vmem_to_hbm [thread:$0]  %s2150, 128, %s2152, %s2133
        $region64: #{gnn_forward.1} parent=59 // pred_fallthru
          _
        // Predicated region
        $region65: #{gnn_forward.1} parent=59 // pred_check
          %p2155 = pneg %p290
        $region66: #{gnn_forward.1} parent=59 // pred_check_branch
          %2157 = sbr.rel (%p2155) target = $region68
        $region67: #{gnn_forward.1} parent=59 // pred_region
          _
        $region68: #{gnn_forward.1} parent=59 // pred_fallthru
          _
      $region60: #{gnn_forward.1} parent=5 // pred_fallthru
        _
      %p2158 = scmp.le.s32.totalorder 2, %s21
      // Predicated region
      $region69: #{gnn_forward.1} parent=5 // pred_check
        %p2159 = pneg %p2158
      $region70: #{gnn_forward.1} parent=5 // pred_check_branch
        %2161 = sbr.rel (%p2159) target = $region72
      $region71: #{gnn_forward.1} parent=5 // pred_region
        %s2162 = ssub.s32 %s21, 2
        // Predicated region
        $region73: #{gnn_forward.1} parent=71 // pred_check
          %p2163 = pneg %p270
        $region74: #{gnn_forward.1} parent=71 // pred_check_branch
          %2165 = sbr.rel (%p2163) target = $region76
        $region75: #{gnn_forward.1} parent=71 // pred_region
          %s2166 = sand.u32 %s255, 1
          %s2167 = scalar_lea.sflag [#allocation3], %s2166
          %s2168 = sand.u32 %s255, 1
          %s2169 = smul.addr %s2168, 8
          %s2170 = scalar_lea.vmem [#allocation2], %s2169
          %2172 = dma.done %s2167, 128
        $region76: #{gnn_forward.1} parent=71 // pred_fallthru
          _
        // Predicated region
        $region77: #{gnn_forward.1} parent=71 // pred_check
          %p2173 = pneg %p296
        $region78: #{gnn_forward.1} parent=71 // pred_check_branch
          %2175 = sbr.rel (%p2173) target = $region80
        $region79: #{gnn_forward.1} parent=71 // pred_region
          %p2176 = scmp.lt.s32.totalorder %s27, 1
          %s2177 = scalar_select %p2176, %s27, 1
          %s2178 = smul.addr %s2177, 8
          %s2179 = scalar_lea.vmem %s11, %s2178
        $region80: #{gnn_forward.1} parent=71 // pred_fallthru
          _
      $region72: #{gnn_forward.1} parent=5 // pred_fallthru
        _
    $region6: #{gnn_forward.1} parent=1 // loop_footer
      %s25 = sadd.s32 1, %s21
    $region7: #{gnn_forward.1} parent=1 // loop_footer_branch
      %20 = sbr.rel target = $region3
    $region8: #{gnn_forward.1} parent=1 // loop_exit
      _
    %2180 = vsyncpa [#allocation3], 1
    %s2181 = scalar_lea.sflag [#allocation3], 1
    %2182 = vsyncpa %s2181, 1

</llo_original>
